<compile_context>
chip_gen: v7x
topology: tpu7x:2x2x1
jax: 0.10.0
libtpu: 0.0.40
codegen_flags: <defaults>
</compile_context>

<pallas_src>
import math

import jax
import jax.numpy as jnp
import numpy as np
from jax.experimental import pallas as pl
from jax.experimental.pallas import tpu as pltpu


def _round_up(x, m):
    return (x + m - 1) // m * m


# ---------------------------------------------------------------------------
# Host-side (one-time, in __init__) construction of the structured operands.
# ---------------------------------------------------------------------------
def _build_layer_operands(w, b, f_in, k_in_pad, sw, pw, lane=128):
    """Fold freq taps, freq zero-padding and the ceil-mode freq-pool phase into
    lane-dense matmul operands.

    Column layout: col = p * n_pad + (co * f_pool + wf)   (channel-major, each
    phase block lane-padded to n_pad).  Ceil-mode phases that fall past the
    conv output replicate phase 0 of the same window, so the in-kernel max
    over phases is exact even before bias/ReLU.

    Returns:
      w_fold : (kh, k_in_pad, pw * n_pad) float32
      b_fold : (1, n_pad)                 float32
      f_pool, n_valid, n_pad
    """
    c_out, c_in, kh, kw = w.shape
    f_out = (f_in + 2 - kw) // sw + 1            # conv freq padding = 1
    f_pool = -(-f_out // pw)                     # ceil-mode freq pool
    n_valid = c_out * f_pool
    n_pad = _round_up(n_valid, lane)
    w_fold = np.zeros((kh, k_in_pad, pw * n_pad), np.float32)
    b_fold = np.zeros((1, n_pad), np.float32)
    for co in range(c_out):
        for wf in range(f_pool):
            col = co * f_pool + wf
            b_fold[0, col] = b[co]
            for p in range(pw):
                fo = wf * pw + p
                # ceil-mode: out-of-range phase replicates phase 0 (exact max)
                fo_eff = fo if fo < f_out else wf * pw
                for dt in range(kh):
                    for df in range(kw):
                        fi = fo_eff * sw + df - 1          # conv freq pad = 1
                        if 0 <= fi < f_in:
                            for ci in range(c_in):
                                w_fold[dt, ci * f_in + fi, p * n_pad + col] += \
                                    w[co, ci, dt, df]
    return w_fold, b_fold, f_pool, n_valid, n_pad


# ---------------------------------------------------------------------------
# Fused whole-encoder kernel: one grid step == one batch element.
# ---------------------------------------------------------------------------
def _make_encoder_kernel(layer_specs, fuse_bn, mxu_dtype):
    """layer_specs: list of dicts of static ints:
       kh, sh, ph, pw, k_valid, k_pad, n_pad, t_in, to_pre, to_pool."""
    n_layers = len(layer_specs)

    def kernel(*refs):
        it = iter(refs)
        x_ref = next(it)
        w_refs, b_refs = [], []
        for _ in range(n_layers):
            w_refs.append(next(it))
            b_refs.append(next(it))
        if fuse_bn:
            bn_w_ref = next(it)
            bn_b_ref = next(it)
        o_ref = next(it)
        buf_refs = [next(it) for _ in range(n_layers)]
        pp_refs = {}
        for l, spec in enumerate(layer_specs):
            if spec['ph'] > 1:
                pp_refs[l] = next(it)

        # --- stage the input block into a zero-haloed, lane-padded buffer ---
        s0 = layer_specs[0]
        t0, k0, k0_pad = s0['t_in'], s0['k_valid'], s0['k_pad']
        buf0 = buf_refs[0]
        buf0[...] = jnp.zeros((t0 + 2, k0_pad), jnp.float32)
        buf0[pl.ds(1, t0), pl.ds(0, k0)] = x_ref[0].astype(jnp.float32)

        # --- fused conv(pad=1) + bias + ReLU + ceil-mode max-pool per layer ---
        for l, spec in enumerate(layer_specs):
            kh, sh, ph, pw = spec['kh'], spec['sh'], spec['ph'], spec['pw']
            n_pad = spec['n_pad']
            to_pre, to_pool = spec['to_pre'], spec['to_pool']
            a_in = buf_refs[l]
            w_ref, b_ref = w_refs[l], b_refs[l]

            # conv as kh MXU matmuls against the folded (Kpad, pw*Npad) weights
            acc = None
            for dt in range(kh):
                if sh > 1:
                    rows = a_in[pl.ds(dt, to_pre, stride=sh), :]
                else:
                    rows = a_in[pl.ds(dt, to_pre), :]
                part = jnp.dot(rows.astype(mxu_dtype), w_ref[dt],
                               preferred_element_type=jnp.float32)
                acc = part if dt == 0 else acc + part

            # freq pool: elementwise max over the pw lane-phase slices
            # (padded ceil-mode phases replicate phase 0 -> exact pre-bias).
            y = acc[:, 0:n_pad]
            for p in range(1, pw):
                y = jnp.maximum(y, acc[:, p * n_pad:(p + 1) * n_pad])

            # bias (identical across freq phases) + ReLU, all f32
            y = jnp.maximum(y + b_ref[...], 0.0)

            # ceil-mode time max-pool: strided sublane reads + elementwise max.
            # Tail rows replicate the last valid row so the max is exact with
            # no sign assumptions.
            if ph > 1:
                pp = pp_refs[l]
                rows_pp = to_pool * ph
                pp[pl.ds(0, to_pre), :] = y
                if rows_pp > to_pre:
                    pp[pl.ds(to_pre, rows_pp - to_pre), :] = jnp.broadcast_to(
                        y[to_pre - 1:to_pre, :], (rows_pp - to_pre, n_pad))
                pooled = pp[pl.ds(0, to_pool, stride=ph), :]
                for q in range(1, ph):
                    pooled = jnp.maximum(
                        pooled, pp[pl.ds(q, to_pool, stride=ph), :])
            else:
                pooled = y

            if l + 1 < n_layers:
                # stage into the next layer's zero-haloed VMEM buffer
                # (never touches HBM); lane padding columns are already zero.
                nxt = buf_refs[l + 1]
                zrow = jnp.zeros((1, n_pad), jnp.float32)
                nxt[pl.ds(0, 1), :] = zrow
                nxt[pl.ds(to_pool + 1, 1), :] = zrow
                nxt[pl.ds(1, to_pool), :] = pooled
            else:
                if fuse_bn:
                    pooled = jnp.dot(pooled.astype(mxu_dtype), bn_w_ref[...],
                                     preferred_element_type=jnp.float32)
                    pooled = pooled + bn_b_ref[...]
                o_ref[0] = pooled.astype(o_ref.dtype)

    return kernel


# ---------------------------------------------------------------------------
# CNNEncoder (forward semantics of the PyTorch module, inference mode)
# ---------------------------------------------------------------------------
class CNNEncoderPallas:
    def __init__(self, input_dim, in_channel, channels, kernel_sizes, strides,
                 poolings, dropout=0.0, batch_norm=False, residual=False,
                 bottleneck_dim=0, key=None, mxu_dtype=jnp.float32):
        assert input_dim % in_channel == 0
        assert len(channels) > 0
        assert len(channels) == len(kernel_sizes) == len(strides) == len(poolings)
        # TODO(synk): dropout is identity (inference); batch_norm / residual
        #             are not part of this configuration.
        assert not batch_norm and not residual

        self.in_channel = in_channel
        self.input_freq = input_dim // in_channel
        self.channels = list(channels)
        self.kernel_sizes = [tuple(map(int, k)) for k in kernel_sizes]
        self.strides = [tuple(map(int, s)) for s in strides]
        self.bottleneck_dim = bottleneck_dim
        self.mxu_dtype = mxu_dtype
        self._pools = []
        for pool in poolings:
            if len(pool) > 0 and int(np.prod(pool)) > 1:
                self._pools.append((int(pool[0]), int(pool[1])))
            else:
                self._pools.append((1, 1))

        if key is None:
            key = jax.random.PRNGKey(0)

        in_ch, in_freq = in_channel, self.input_freq
        k_pad = _round_up(in_ch * in_freq, 128)
        self.conv_params = []     # raw (w, b), used by the pure-JAX reference
        self._layers = []         # precomputed, lane-dense kernel operands
        for l in range(len(self.channels)):
            kh, kw = self.kernel_sizes[l]
            sh, sw = self.strides[l]
            ph, pw = self._pools[l]
            key, wk, bk = jax.random.split(key, 3)
            fan_in = in_ch * kh * kw
            bound = 1.0 / math.sqrt(fan_in)
            w = jax.random.uniform(wk, (self.channels[l], in_ch, kh, kw),
                                   jnp.float32, -bound, bound)
            b = jax.random.uniform(bk, (self.channels[l],), jnp.float32,
                                   -bound, bound)
            self.conv_params.append((w, b))
            w_fold, b_fold, f_pool, n_valid, n_pad = _build_layer_operands(
                np.asarray(w), np.asarray(b), in_freq, k_pad, sw, pw)
            self._layers.append(dict(
                kh=kh, sh=sh, ph=ph, pw=pw,
                k_valid=in_ch * in_freq, k_pad=k_pad,
                n_valid=n_valid, n_pad=n_pad,
                w_fold=jnp.asarray(w_fold, mxu_dtype),
                b_fold=jnp.asarray(b_fold, jnp.float32)))
            in_freq = f_pool
            in_ch = self.channels[l]
            k_pad = n_pad          # lane padding carried into next layer's K

        self._feat_dim = int(in_ch * in_freq)     # pre-bottleneck feature dim
        self._output_dim = self._feat_dim
        self.bn_w = None
        self.bn_b = None
        self._bn_w_pad = None
        self._bn_b_pad = None
        if bottleneck_dim > 0:
            key, wk, bk = jax.random.split(key, 3)
            bound = 1.0 / math.sqrt(self._feat_dim)
            self.bn_w = jax.random.uniform(
                wk, (self._feat_dim, bottleneck_dim), jnp.float32, -bound, bound)
            self.bn_b = jax.random.uniform(
                bk, (bottleneck_dim,), jnp.float32, -bound, bound)
            # Lane-padded operands fused into the last layer's epilogue.  The
            # PyTorch bottleneck input index c*F + f equals our channel-major
            # activation layout, so no permutation; padded rows/cols are zero.
            last = self._layers[-1]
            bn_pad = _round_up(bottleneck_dim, 128)
            w_pad = np.zeros((last['n_pad'], bn_pad), np.float32)
            w_pad[:self._feat_dim, :bottleneck_dim] = np.asarray(self.bn_w)
            b_pad = np.zeros((1, bn_pad), np.float32)
            b_pad[0, :bottleneck_dim] = np.asarray(self.bn_b)
            self._bn_w_pad = jnp.asarray(w_pad, mxu_dtype)
            self._bn_b_pad = jnp.asarray(b_pad, jnp.float32)
            self._output_dim = bottleneck_dim

    @property
    def output_dim(self):
        return self._output_dim

    def _conv_out_size(self, size, dim):
        """Python-side equivalent of ConvOutSize (host scalar math)."""
        for l in range(len(self.channels)):
            k = self.kernel_sizes[l][dim]
            s = self.strides[l][dim]
            size = int(math.floor((size + 2 * 1 - k) / s + 1))   # conv, pad 1
            ph, pw = self._pools[l]
            if ph * pw > 1:
                p = (ph, pw)[dim]
                size = int(math.ceil((size - p) / p + 1))        # pool, ceil
        return size

    def __call__(self, xs, xlens):
        # xs: [B, T, input_dim] -- input_dim is already channel-major (C, F),
        # which is the activation layout used by the kernel.
        B, T, D = xs.shape
        assert D == self.in_channel * self.input_freq
        fuse_bn = self._bn_w_pad is not None

        # Static per-call time sizes per layer.
        layer_specs = []
        t_cur = int(T)
        for meta in self._layers:
            kh, sh, ph = meta['kh'], meta['sh'], meta['ph']
            to_pre = (t_cur + 2 - kh) // sh + 1                   # conv, pad 1
            to_pool = -(-to_pre // ph)                            # pool, ceil
            spec = dict(meta)
            spec.update(t_in=t_cur, to_pre=to_pre, to_pool=to_pool)
            layer_specs.append(spec)
            t_cur = to_pool
        t_out = t_cur
        n_out_pad = (self._bn_w_pad.shape[1] if fuse_bn
                     else layer_specs[-1]['n_pad'])
        n_out_valid = self._output_dim

        inputs = [xs]
        in_specs = [pl.BlockSpec((1, T, D), lambda b: (b, 0, 0))]
        for spec in layer_specs:
            inputs.append(spec['w_fold'])
            in_specs.append(
                pl.BlockSpec(spec['w_fold'].shape, lambda b: (0, 0, 0)))
            inputs.append(spec['b_fold'])
            in_specs.append(
                pl.BlockSpec(spec['b_fold'].shape, lambda b: (0, 0)))
        if fuse_bn:
            inputs += [self._bn_w_pad, self._bn_b_pad]
            in_specs += [pl.BlockSpec(self._bn_w_pad.shape, lambda b: (0, 0)),
                         pl.BlockSpec(self._bn_b_pad.shape, lambda b: (0, 0))]

        scratch_shapes = []
        # zero-haloed, lane-padded activation buffer per layer input (VMEM)
        scratch_shapes.append(
            pltpu.VMEM((layer_specs[0]['t_in'] + 2, layer_specs[0]['k_pad']),
                       jnp.float32))
        for l in range(1, len(layer_specs)):
            prev = layer_specs[l - 1]
            scratch_shapes.append(
                pltpu.VMEM((prev['to_pool'] + 2, prev['n_pad']), jnp.float32))
        # pre-pool staging buffers for layers with time pooling
        for spec in layer_specs:
            if spec['ph'] > 1:
                scratch_shapes.append(
                    pltpu.VMEM((spec['to_pool'] * spec['ph'], spec['n_pad']),
                               jnp.float32))

        kernel = _make_encoder_kernel(layer_specs, fuse_bn, self.mxu_dtype)
        out = pl.pallas_call(
            kernel,
            out_shape=jax.ShapeDtypeStruct((B, t_out, n_out_pad), jnp.float32),
            grid=(B,),
            in_specs=in_specs,
            out_specs=pl.BlockSpec((1, t_out, n_out_pad), lambda b: (b, 0, 0)),
            scratch_shapes=scratch_shapes,
            compiler_params=pltpu.CompilerParams(
                dimension_semantics=("parallel",)),
        )(*inputs)

        feats = out[:, :, :n_out_valid]       # trim lane padding (host side)
        out_lens = [self._conv_out_size(int(xl), dim=0) for xl in xlens]
        return feats, out_lens


# ---------------------------------------------------------------------------
# Pure-JAX (XLA) reference of the PyTorch module, for correctness checking.
# ---------------------------------------------------------------------------
def _reference_forward(enc, xs):
    B, T, D = xs.shape
    F = D // enc.in_channel
    x = xs.astype(jnp.float32).reshape(B, T, enc.in_channel, F).transpose(0, 2, 1, 3)
    for l, (w, b) in enumerate(enc.conv_params):
        sh, sw = enc.strides[l]
        y = jax.lax.conv_general_dilated(
            x, w, window_strides=(sh, sw), padding=((1, 1), (1, 1)),
            dimension_numbers=('NCHW', 'OIHW', 'NCHW'),
            precision=jax.lax.Precision.HIGHEST)
        y = jnp.maximum(y + b.reshape(1, -1, 1, 1), 0.0)
        ph, pw = enc._pools[l]
        if ph * pw > 1:
            H, W = y.shape[2], y.shape[3]
            Ho, Wo = -(-H // ph), -(-W // pw)
            y = jax.lax.reduce_window(
                y, -jnp.inf, jax.lax.max,
                window_dimensions=(1, 1, ph, pw),
                window_strides=(1, 1, ph, pw),
                padding=((0, 0), (0, 0), (0, Ho * ph - H), (0, Wo * pw - W)))
        x = y
    B2, C, To, Fo = x.shape
    feats = x.transpose(0, 2, 1, 3).reshape(B2, To, C * Fo)
    if enc.bottleneck_dim > 0:
        feats = jnp.dot(feats, enc.bn_w,
                        precision=jax.lax.Precision.HIGHEST) + enc.bn_b
    return feats


# ---------------------------------------------------------------------------
if __name__ == "__main__":
    enc = CNNEncoderPallas(
        input_dim=16,
        in_channel=1,
        channels=[4, 8],
        kernel_sizes=[[3, 3], [3, 3]],
        strides=[[1, 1], [1, 1]],
        poolings=[[2, 2], [2, 2]],
        dropout=0.0,
        batch_norm=False,
        residual=False,
        bottleneck_dim=32,
        key=jax.random.PRNGKey(0),
    )

    xs = jax.random.normal(jax.random.PRNGKey(0), (2, 8, 16), dtype=jnp.float32)
    xlens = [8, 6]

    feats, out_lens = enc(xs, xlens)
    feats = jax.block_until_ready(feats)

    assert feats.shape == (2, 2, enc.output_dim), feats.shape
    assert out_lens == [2, 2], out_lens

    # Correctness vs a pure-JAX reference of the PyTorch module (f32 path uses
    # a tight tolerance so indexing errors in the structured fold can't hide).
    ref = jax.block_until_ready(_reference_forward(enc, xs))
    scale = float(jnp.max(jnp.abs(ref)))
    err = float(jnp.max(jnp.abs(feats - ref)))
    assert err <= 1e-4 * scale + 1e-5, (err, scale)

    # bf16 MXU-operand variant (fast path on v6e/v7x); f32 accumulate/epilogue.
    enc_bf16 = CNNEncoderPallas(
        input_dim=16, in_channel=1, channels=[4, 8],
        kernel_sizes=[[3, 3], [3, 3]], strides=[[1, 1], [1, 1]],
        poolings=[[2, 2], [2, 2]], bottleneck_dim=32,
        key=jax.random.PRNGKey(0), mxu_dtype=jnp.bfloat16)
    feats_bf16, _ = enc_bf16(xs, xlens)
    feats_bf16 = jax.block_until_ready(feats_bf16)
    err_bf16 = float(jnp.max(jnp.abs(feats_bf16 - ref)))
    assert err_bf16 <= 5e-2 + 5e-2 * scale, (err_bf16, scale)

    print("KERNEL_OK")
</pallas_src>

<mosaic_0001>
module attributes {stable_mosaic.version = 11 : i64} {
  func.func @kernel(%arg0: i32, %arg1: memref<1x8x16xf32, #tpu.memory_space<vmem>>, %arg2: memref<3x128x256xf32, #tpu.memory_space<vmem>>, %arg3: memref<1x128xf32, #tpu.memory_space<vmem>>, %arg4: memref<3x128x256xf32, #tpu.memory_space<vmem>>, %arg5: memref<1x128xf32, #tpu.memory_space<vmem>>, %arg6: memref<128x128xf32, #tpu.memory_space<vmem>>, %arg7: memref<1x128xf32, #tpu.memory_space<vmem>>, %arg8: memref<1x2x128xf32, #tpu.memory_space<vmem>>, %arg9: memref<10x128xf32, #tpu.memory_space<vmem>>, %arg10: memref<6x128xf32, #tpu.memory_space<vmem>>, %arg11: memref<8x128xf32, #tpu.memory_space<vmem>>, %arg12: memref<4x128xf32, #tpu.memory_space<vmem>>) attributes {dimension_semantics = [#tpu.dimension_semantics<parallel>], iteration_bounds = array<i64: 2>, scalar_prefetch = 0 : i64, scratch_operands = 4 : i64, tpu.core_type = #tpu.core_type<tc>, window_params = [{transform_indices = @transform_0, window_bounds = array<i64: 1, 8, 16>}, {pipeline_mode = #tpu.pipeline_mode<synchronous>, transform_indices = @transform_1, window_bounds = array<i64: 3, 128, 256>}, {pipeline_mode = #tpu.pipeline_mode<synchronous>, transform_indices = @transform_2, window_bounds = array<i64: 1, 128>}, {pipeline_mode = #tpu.pipeline_mode<synchronous>, transform_indices = @transform_3, window_bounds = array<i64: 3, 128, 256>}, {pipeline_mode = #tpu.pipeline_mode<synchronous>, transform_indices = @transform_4, window_bounds = array<i64: 1, 128>}, {pipeline_mode = #tpu.pipeline_mode<synchronous>, transform_indices = @transform_5, window_bounds = array<i64: 128, 128>}, {pipeline_mode = #tpu.pipeline_mode<synchronous>, transform_indices = @transform_6, window_bounds = array<i64: 1, 128>}, {transform_indices = @transform_7, window_bounds = array<i64: 1, 2, 128>}]} {
    %cst = arith.constant 0.000000e+00 : f32
    %0 = vector.broadcast %cst : f32 to vector<10x128xf32>
    %c0 = arith.constant 0 : index
    %c0_0 = arith.constant 0 : index
    %1 = vector.load %arg9[%c0, %c0_0] : memref<10x128xf32, #tpu.memory_space<vmem>>, vector<10x128xf32>
    tpu.vector_store %arg9[%c0, %c0_0], %0 {strides = array<i32>} : memref<10x128xf32, #tpu.memory_space<vmem>>, vector<10x128xf32>,
    %c0_1 = arith.constant 0 : index
    %c0_2 = arith.constant 0 : index
    %c0_3 = arith.constant 0 : index
    %2 = vector.load %arg1[%c0_1, %c0_2, %c0_3] : memref<1x8x16xf32, #tpu.memory_space<vmem>>, vector<1x8x16xf32>
    %3 = vector.shape_cast %2 : vector<1x8x16xf32> to vector<8x16xf32>
    %c1 = arith.constant 1 : index
    %c0_4 = arith.constant 0 : index
    %4 = vector.load %arg9[%c1, %c0_4] : memref<10x128xf32, #tpu.memory_space<vmem>>, vector<8x16xf32>
    tpu.vector_store %arg9[%c1, %c0_4], %3 {strides = array<i32>} : memref<10x128xf32, #tpu.memory_space<vmem>>, vector<8x16xf32>,
    %c0_5 = arith.constant 0 : index
    %c0_6 = arith.constant 0 : index
    %5 = vector.load %arg9[%c0_5, %c0_6] : memref<10x128xf32, #tpu.memory_space<vmem>>, vector<8x128xf32>
    %c0_7 = arith.constant 0 : index
    %c0_8 = arith.constant 0 : index
    %c0_9 = arith.constant 0 : index
    %6 = vector.load %arg2[%c0_7, %c0_8, %c0_9] : memref<3x128x256xf32, #tpu.memory_space<vmem>>, vector<1x128x256xf32>
    %7 = vector.shape_cast %6 : vector<1x128x256xf32> to vector<128x256xf32>
    %cst_10 = arith.constant dense<0.000000e+00> : vector<8x256xf32>
    %8 = tpu.matmul %5, %7, %cst_10 {dimension_numbers = #tpu.dot_dimension_numbers<[1], [0], [0], [1], [0, 0, 1, 1], [], []>} : vector<8x128xf32>, vector<128x256xf32>, vector<8x256xf32> -> vector<8x256xf32>
    %c1_11 = arith.constant 1 : index
    %c0_12 = arith.constant 0 : index
    %9 = vector.load %arg9[%c1_11, %c0_12] : memref<10x128xf32, #tpu.memory_space<vmem>>, vector<8x128xf32>
    %c1_13 = arith.constant 1 : index
    %c0_14 = arith.constant 0 : index
    %c0_15 = arith.constant 0 : index
    %10 = vector.load %arg2[%c1_13, %c0_14, %c0_15] : memref<3x128x256xf32, #tpu.memory_space<vmem>>, vector<1x128x256xf32>
    %11 = vector.shape_cast %10 : vector<1x128x256xf32> to vector<128x256xf32>
    %cst_16 = arith.constant dense<0.000000e+00> : vector<8x256xf32>
    %12 = tpu.matmul %9, %11, %cst_16 {dimension_numbers = #tpu.dot_dimension_numbers<[1], [0], [0], [1], [0, 0, 1, 1], [], []>} : vector<8x128xf32>, vector<128x256xf32>, vector<8x256xf32> -> vector<8x256xf32>
    %13 = arith.addf %8, %12 : vector<8x256xf32>
    %c2 = arith.constant 2 : index
    %c0_17 = arith.constant 0 : index
    %14 = vector.load %arg9[%c2, %c0_17] : memref<10x128xf32, #tpu.memory_space<vmem>>, vector<8x128xf32>
    %c2_18 = arith.constant 2 : index
    %c0_19 = arith.constant 0 : index
    %c0_20 = arith.constant 0 : index
    %15 = vector.load %arg2[%c2_18, %c0_19, %c0_20] : memref<3x128x256xf32, #tpu.memory_space<vmem>>, vector<1x128x256xf32>
    %16 = vector.shape_cast %15 : vector<1x128x256xf32> to vector<128x256xf32>
    %cst_21 = arith.constant dense<0.000000e+00> : vector<8x256xf32>
    %17 = tpu.matmul %14, %16, %cst_21 {dimension_numbers = #tpu.dot_dimension_numbers<[1], [0], [0], [1], [0, 0, 1, 1], [], []>} : vector<8x128xf32>, vector<128x256xf32>, vector<8x256xf32> -> vector<8x256xf32>
    %18 = arith.addf %13, %17 : vector<8x256xf32>
    %19 = vector.extract_strided_slice %18 {offsets = [0, 0], sizes = [8, 128], strides = [1, 1]} : vector<8x256xf32> to vector<8x128xf32>
    %20 = vector.extract_strided_slice %18 {offsets = [0, 128], sizes = [8, 128], strides = [1, 1]} : vector<8x256xf32> to vector<8x128xf32>
    %21 = arith.maximumf %19, %20 : vector<8x128xf32>
    %c0_22 = arith.constant 0 : index
    %c0_23 = arith.constant 0 : index
    %22 = vector.load %arg3[%c0_22, %c0_23] : memref<1x128xf32, #tpu.memory_space<vmem>>, vector<1x128xf32>
    %23 = vector.broadcast %22 : vector<1x128xf32> to vector<8x128xf32>
    %24 = arith.addf %21, %23 : vector<8x128xf32>
    %cst_24 = arith.constant 0.000000e+00 : f32
    %25 = vector.broadcast %cst_24 : f32 to vector<8x128xf32>
    %26 = arith.maximumf %24, %25 : vector<8x128xf32>
    %c0_25 = arith.constant 0 : index
    %c0_26 = arith.constant 0 : index
    %27 = vector.load %arg11[%c0_25, %c0_26] : memref<8x128xf32, #tpu.memory_space<vmem>>, vector<8x128xf32>
    tpu.vector_store %arg11[%c0_25, %c0_26], %26 {strides = array<i32>} : memref<8x128xf32, #tpu.memory_space<vmem>>, vector<8x128xf32>,
    %c0_27 = arith.constant 0 : index
    %c0_28 = arith.constant 0 : index
    %28 = tpu.strided_load %arg11[%c0_27, %c0_28] {strides = array<i32: 2, 1>} : memref<8x128xf32, #tpu.memory_space<vmem>>, vector<4x128xf32>
    %c1_29 = arith.constant 1 : index
    %c0_30 = arith.constant 0 : index
    %29 = tpu.strided_load %arg11[%c1_29, %c0_30] {strides = array<i32: 2, 1>} : memref<8x128xf32, #tpu.memory_space<vmem>>, vector<4x128xf32>
    %30 = arith.maximumf %28, %29 : vector<4x128xf32>
    %cst_31 = arith.constant 0.000000e+00 : f32
    %31 = vector.broadcast %cst_31 : f32 to vector<1x128xf32>
    %c0_32 = arith.constant 0 : index
    %c0_33 = arith.constant 0 : index
    %32 = vector.load %arg10[%c0_32, %c0_33] : memref<6x128xf32, #tpu.memory_space<vmem>>, vector<1x128xf32>
    tpu.vector_store %arg10[%c0_32, %c0_33], %31 {strides = array<i32>} : memref<6x128xf32, #tpu.memory_space<vmem>>, vector<1x128xf32>,
    %c5 = arith.constant 5 : index
    %c0_34 = arith.constant 0 : index
    %33 = vector.load %arg10[%c5, %c0_34] : memref<6x128xf32, #tpu.memory_space<vmem>>, vector<1x128xf32>
    tpu.vector_store %arg10[%c5, %c0_34], %31 {strides = array<i32>} : memref<6x128xf32, #tpu.memory_space<vmem>>, vector<1x128xf32>,
    %c1_35 = arith.constant 1 : index
    %c0_36 = arith.constant 0 : index
    %34 = vector.load %arg10[%c1_35, %c0_36] : memref<6x128xf32, #tpu.memory_space<vmem>>, vector<4x128xf32>
    tpu.vector_store %arg10[%c1_35, %c0_36], %30 {strides = array<i32>} : memref<6x128xf32, #tpu.memory_space<vmem>>, vector<4x128xf32>,
    %c0_37 = arith.constant 0 : index
    %c0_38 = arith.constant 0 : index
    %35 = vector.load %arg10[%c0_37, %c0_38] : memref<6x128xf32, #tpu.memory_space<vmem>>, vector<4x128xf32>
    %c0_39 = arith.constant 0 : index
    %c0_40 = arith.constant 0 : index
    %c0_41 = arith.constant 0 : index
    %36 = vector.load %arg4[%c0_39, %c0_40, %c0_41] : memref<3x128x256xf32, #tpu.memory_space<vmem>>, vector<1x128x256xf32>
    %37 = vector.shape_cast %36 : vector<1x128x256xf32> to vector<128x256xf32>
    %cst_42 = arith.constant dense<0.000000e+00> : vector<4x256xf32>
    %38 = tpu.matmul %35, %37, %cst_42 {dimension_numbers = #tpu.dot_dimension_numbers<[1], [0], [0], [1], [0, 0, 1, 1], [], []>} : vector<4x128xf32>, vector<128x256xf32>, vector<4x256xf32> -> vector<4x256xf32>
    %c1_43 = arith.constant 1 : index
    %c0_44 = arith.constant 0 : index
    %39 = vector.load %arg10[%c1_43, %c0_44] : memref<6x128xf32, #tpu.memory_space<vmem>>, vector<4x128xf32>
    %c1_45 = arith.constant 1 : index
    %c0_46 = arith.constant 0 : index
    %c0_47 = arith.constant 0 : index
    %40 = vector.load %arg4[%c1_45, %c0_46, %c0_47] : memref<3x128x256xf32, #tpu.memory_space<vmem>>, vector<1x128x256xf32>
    %41 = vector.shape_cast %40 : vector<1x128x256xf32> to vector<128x256xf32>
    %cst_48 = arith.constant dense<0.000000e+00> : vector<4x256xf32>
    %42 = tpu.matmul %39, %41, %cst_48 {dimension_numbers = #tpu.dot_dimension_numbers<[1], [0], [0], [1], [0, 0, 1, 1], [], []>} : vector<4x128xf32>, vector<128x256xf32>, vector<4x256xf32> -> vector<4x256xf32>
    %43 = arith.addf %38, %42 : vector<4x256xf32>
    %c2_49 = arith.constant 2 : index
    %c0_50 = arith.constant 0 : index
    %44 = vector.load %arg10[%c2_49, %c0_50] : memref<6x128xf32, #tpu.memory_space<vmem>>, vector<4x128xf32>
    %c2_51 = arith.constant 2 : index
    %c0_52 = arith.constant 0 : index
    %c0_53 = arith.constant 0 : index
    %45 = vector.load %arg4[%c2_51, %c0_52, %c0_53] : memref<3x128x256xf32, #tpu.memory_space<vmem>>, vector<1x128x256xf32>
    %46 = vector.shape_cast %45 : vector<1x128x256xf32> to vector<128x256xf32>
    %cst_54 = arith.constant dense<0.000000e+00> : vector<4x256xf32>
    %47 = tpu.matmul %44, %46, %cst_54 {dimension_numbers = #tpu.dot_dimension_numbers<[1], [0], [0], [1], [0, 0, 1, 1], [], []>} : vector<4x128xf32>, vector<128x256xf32>, vector<4x256xf32> -> vector<4x256xf32>
    %48 = arith.addf %43, %47 : vector<4x256xf32>
    %49 = vector.extract_strided_slice %48 {offsets = [0, 0], sizes = [4, 128], strides = [1, 1]} : vector<4x256xf32> to vector<4x128xf32>
    %50 = vector.extract_strided_slice %48 {offsets = [0, 128], sizes = [4, 128], strides = [1, 1]} : vector<4x256xf32> to vector<4x128xf32>
    %51 = arith.maximumf %49, %50 : vector<4x128xf32>
    %c0_55 = arith.constant 0 : index
    %c0_56 = arith.constant 0 : index
    %52 = vector.load %arg5[%c0_55, %c0_56] : memref<1x128xf32, #tpu.memory_space<vmem>>, vector<1x128xf32>
    %53 = vector.broadcast %52 : vector<1x128xf32> to vector<4x128xf32>
    %54 = arith.addf %51, %53 : vector<4x128xf32>
    %cst_57 = arith.constant 0.000000e+00 : f32
    %55 = vector.broadcast %cst_57 : f32 to vector<4x128xf32>
    %56 = arith.maximumf %54, %55 : vector<4x128xf32>
    %c0_58 = arith.constant 0 : index
    %c0_59 = arith.constant 0 : index
    %57 = vector.load %arg12[%c0_58, %c0_59] : memref<4x128xf32, #tpu.memory_space<vmem>>, vector<4x128xf32>
    tpu.vector_store %arg12[%c0_58, %c0_59], %56 {strides = array<i32>} : memref<4x128xf32, #tpu.memory_space<vmem>>, vector<4x128xf32>,
    %c0_60 = arith.constant 0 : index
    %c0_61 = arith.constant 0 : index
    %58 = tpu.strided_load %arg12[%c0_60, %c0_61] {strides = array<i32: 2, 1>} : memref<4x128xf32, #tpu.memory_space<vmem>>, vector<2x128xf32>
    %c1_62 = arith.constant 1 : index
    %c0_63 = arith.constant 0 : index
    %59 = tpu.strided_load %arg12[%c1_62, %c0_63] {strides = array<i32: 2, 1>} : memref<4x128xf32, #tpu.memory_space<vmem>>, vector<2x128xf32>
    %60 = arith.maximumf %58, %59 : vector<2x128xf32>
    %c0_64 = arith.constant 0 : index
    %c0_65 = arith.constant 0 : index
    %61 = vector.load %arg6[%c0_64, %c0_65] : memref<128x128xf32, #tpu.memory_space<vmem>>, vector<128x128xf32>
    %cst_66 = arith.constant dense<0.000000e+00> : vector<2x128xf32>
    %62 = tpu.matmul %60, %61, %cst_66 {dimension_numbers = #tpu.dot_dimension_numbers<[1], [0], [0], [1], [0, 0, 1, 1], [], []>} : vector<2x128xf32>, vector<128x128xf32>, vector<2x128xf32> -> vector<2x128xf32>
    %c0_67 = arith.constant 0 : index
    %c0_68 = arith.constant 0 : index
    %63 = vector.load %arg7[%c0_67, %c0_68] : memref<1x128xf32, #tpu.memory_space<vmem>>, vector<1x128xf32>
    %64 = vector.broadcast %63 : vector<1x128xf32> to vector<2x128xf32>
    %65 = arith.addf %62, %64 : vector<2x128xf32>
    %c0_69 = arith.constant 0 : index
    %c0_70 = arith.constant 0 : index
    %c0_71 = arith.constant 0 : index
    %66 = vector.load %arg8[%c0_69, %c0_70, %c0_71] : memref<1x2x128xf32, #tpu.memory_space<vmem>>, vector<1x2x128xf32>
    %67 = vector.shape_cast %66 : vector<1x2x128xf32> to vector<2x128xf32>
    %68 = vector.shape_cast %65 : vector<2x128xf32> to vector<1x2x128xf32>
    tpu.vector_store %arg8[%c0_69, %c0_70, %c0_71], %68 {strides = array<i32>} : memref<1x2x128xf32, #tpu.memory_space<vmem>>, vector<1x2x128xf32>,
    return
  }
  func.func @transform_0(%arg0: i32) -> (i32, i32, i32) {
    %c0_i32 = arith.constant 0 : i32
    %c0_i32_0 = arith.constant 0 : i32
    %c0_i32_1 = arith.constant 0 : i32
    return %arg0, %c0_i32, %c0_i32_0 : i32, i32, i32
  }
  func.func @transform_1(%arg0: i32) -> (i32, i32, i32) {
    %c0_i32 = arith.constant 0 : i32
    %c0_i32_0 = arith.constant 0 : i32
    %c0_i32_1 = arith.constant 0 : i32
    %c0_i32_2 = arith.constant 0 : i32
    return %c0_i32, %c0_i32_0, %c0_i32_1 : i32, i32, i32
  }
  func.func @transform_2(%arg0: i32) -> (i32, i32) {
    %c0_i32 = arith.constant 0 : i32
    %c0_i32_0 = arith.constant 0 : i32
    %c0_i32_1 = arith.constant 0 : i32
    return %c0_i32, %c0_i32_0 : i32, i32
  }
  func.func @transform_3(%arg0: i32) -> (i32, i32, i32) {
    %c0_i32 = arith.constant 0 : i32
    %c0_i32_0 = arith.constant 0 : i32
    %c0_i32_1 = arith.constant 0 : i32
    %c0_i32_2 = arith.constant 0 : i32
    return %c0_i32, %c0_i32_0, %c0_i32_1 : i32, i32, i32
  }
  func.func @transform_4(%arg0: i32) -> (i32, i32) {
    %c0_i32 = arith.constant 0 : i32
    %c0_i32_0 = arith.constant 0 : i32
    %c0_i32_1 = arith.constant 0 : i32
    return %c0_i32, %c0_i32_0 : i32, i32
  }
  func.func @transform_5(%arg0: i32) -> (i32, i32) {
    %c0_i32 = arith.constant 0 : i32
    %c0_i32_0 = arith.constant 0 : i32
    %c0_i32_1 = arith.constant 0 : i32
    return %c0_i32, %c0_i32_0 : i32, i32
  }
  func.func @transform_6(%arg0: i32) -> (i32, i32) {
    %c0_i32 = arith.constant 0 : i32
    %c0_i32_0 = arith.constant 0 : i32
    %c0_i32_1 = arith.constant 0 : i32
    return %c0_i32, %c0_i32_0 : i32, i32
  }
  func.func @transform_7(%arg0: i32) -> (i32, i32, i32) {
    %c0_i32 = arith.constant 0 : i32
    %c0_i32_0 = arith.constant 0 : i32
    %c0_i32_1 = arith.constant 0 : i32
    return %arg0, %c0_i32, %c0_i32_0 : i32, i32, i32
  }
}

</mosaic_0001>

<llo_original>
// kernel: tpu_custom_call.1
$region0: #{tpu_custom_call.1}
  #allocation0 [shape = 'u32[]', space=smem, size = 0x4, offset = 0x4, fixed_abs, tag = 'smem constant byte address 0x4 - core index']
  #allocation1 [shape = 'u32[144,128]{1,0:T(1,128)}', space=vmem, size = 0x12000, scoped, tag = 'internal scratch']
  #allocation2 [shape = 'f32[10,128]{1,0:T(8,128)}', space=vmem, size = 0x2000, scoped, tag = 'scratch operand']
  #allocation3 [shape = 'f32[6,128]{1,0:T(8,128)}', space=vmem, size = 0x1000, scoped, tag = 'scratch operand']
  #allocation4 [shape = 'f32[8,128]{1,0:T(8,128)}', space=vmem, size = 0x1000, scoped, tag = 'scratch operand']
  #allocation5 [shape = 'f32[4,128]{1,0:T(4,128)}', space=vmem, size = 0x800, scoped, tag = 'scratch operand']
  %s0 = inlined_call_operand.hbm [shape: f32[2,8,16], index: 0, kind: input, shape index: {}]
  %s1 = inlined_call_operand.hbm [shape: f32[3,128,256], index: 1, kind: input, shape index: {}]
  %s2 = inlined_call_operand.vmem [shape: f32[1,128], index: 2, kind: input, shape index: {}]
  %s3 = inlined_call_operand.hbm [shape: f32[3,128,256], index: 3, kind: input, shape index: {}]
  %s4 = inlined_call_operand.vmem [shape: f32[1,128], index: 4, kind: input, shape index: {}]
  %s5 = inlined_call_operand.hbm [shape: f32[128,128], index: 5, kind: input, shape index: {}]
  %s6 = inlined_call_operand.vmem [shape: f32[1,128], index: 6, kind: input, shape index: {}]
  %s7 = inlined_call_operand.hbm [shape: f32[2,2,128], index: 7, kind: output, shape index: {}]
  %s8 = sld [smem:[#allocation0]]
  $region77: #{tpu_custom_call.1} parent=0
    _
  %s10 = ssub.s32 1, %s8
  %s11 = scalar_select 0, %s10, %s8
  $region1: #{tpu_custom_call.1} parent=0
    #allocation6 [shape = 'u8[8192]{0}', space=vmem, size = 0x2000, scoped, tag = 'input window, operand 0']
    #allocation7 [shape = 's32[2]{0}', space=sflag, size = 0x8, scoped, tag = 'scoped memory for tpu_custom_call.1']
    #allocation8 [shape = 's32[2]{0}', space=sflag, size = 0x8, scoped, tag = 'scoped memory for tpu_custom_call.1']
    #allocation9 [shape = 'u8[393216]{0}', space=vmem, size = 0x60000, scoped, tag = 'input window, operand 1, single buffered']
    #allocation10 [shape = 's32[1]{0}', space=sflag, size = 0x4, scoped, tag = 'scoped memory for tpu_custom_call.1']
    #allocation11 [shape = 'u8[393216]{0}', space=vmem, size = 0x60000, scoped, tag = 'input window, operand 3, single buffered']
    #allocation12 [shape = 'u8[65536]{0}', space=vmem, size = 0x10000, scoped, tag = 'input window, operand 5, single buffered']
    #allocation13 [shape = 's32[1]{0}', space=sflag, size = 0x4, scoped, tag = 'scoped memory for tpu_custom_call.1']
    #allocation14 [shape = 'u8[2048]{0}', space=vmem, size = 0x800, scoped, tag = 'output window, operand 0']
    %12 = vsyncpa [#allocation7], 0
    %s13 = scalar_lea.sflag [#allocation7], 1
    %14 = vsyncpa %s13, 0
    %15 = vsyncpa [#allocation10], 0
    %16 = vsyncpa [#allocation13], 0
    %17 = vsyncpa [#allocation8], 0
    %s18 = scalar_lea.sflag [#allocation8], 1
    %19 = vsyncpa %s18, 0
    loop: start=0, step=1, limit=4
    $region2: #{tpu_custom_call.1} parent=1 // loop_pre_header
      _
    $region3: #{tpu_custom_call.1} parent=1 // loop_header
      %s21 = sphi 0, %s25
      %p22 = scmp.ge.s32.totalorder %s21, 4
      %s31 = sphi 0, %s33
      %s34 = sphi 0, %s31
      %s35 = sphi 0, %s34
      %s51 = sphi 0, %s35
      %s55 = sphi 0, %s55
      %s57 = sphi 0, %s55
      %s58 = sphi 0, %s57
      %s72 = sphi 0, %s58
      %s76 = sphi 0, %s76
      %s78 = sphi 0, %s76
      %s79 = sphi 0, %s78
      %s93 = sphi 0, %s79
      %s97 = sphi 0, %s97
      %s99 = sphi 0, %s97
      %s100 = sphi 0, %s99
      %s114 = sphi 0, %s100
      %s118 = sphi 0, %s118
      %s120 = sphi 0, %s118
      %s121 = sphi 0, %s120
      %s135 = sphi 0, %s121
      %s139 = sphi 0, %s139
      %s141 = sphi 0, %s139
      %s142 = sphi 0, %s141
      %s156 = sphi 0, %s142
      %s160 = sphi 0, %s160
      %s162 = sphi 0, %s160
      %s163 = sphi 0, %s162
      %s177 = sphi 0, %s163
      %s183 = sphi 0, %s185
      %s186 = sphi 0, %s183
      %s187 = sphi 0, %s186
      %s203 = sphi 0, %s187
    $region4: #{tpu_custom_call.1} parent=1 // loop_header_branch
      %24 = sbr.rel (%p22) target = $region8
    $region5: #{tpu_custom_call.1} parent=1 // loop_body
      %s26 = ssub.s32 %s21, 1
      %s27 = ssub.s32 %s21, 2
      %s28 = sadd.s32 %s21, 1
      %s29 = ssub.s32 %s21, %s28
      %p30 = scmp.eq.s32.totalorder %s29, 0
      %s32 = sadd.s32 %s31, 1
      %s33 = scalar_select %p30, %s31, %s32
      %p36 = pneg %p30
      %p37 = scmp.eq.s32.totalorder %s21, 1
      %p38 = por %p36, %p37
      %p39 = scmp.ne.s32.totalorder %s31, %s34
      %p40 = scmp.eq.s32.totalorder %s21, 0
      %p41 = por %p39, %p40
      %p42 = scmp.ne.s32.totalorder %s31, %s34
      %p43 = scmp.eq.s32.totalorder %s26, 1
      %p44 = por %p42, %p43
      %p45 = scmp.ne.s32.totalorder %s34, %s35
      %p46 = scmp.eq.s32.totalorder %s26, 0
      %p47 = por %p45, %p46
      %p48 = scmp.ne.s32.totalorder %s34, %s35
      %p49 = scmp.eq.s32.totalorder %s27, 1
      %p50 = por %p48, %p49
      %p52 = scmp.ne.s32.totalorder %s35, %s51
      %p53 = scmp.eq.s32.totalorder %s27, 0
      %p54 = por %p52, %p53
      %s56 = sadd.s32 %s55, 1
      %p59 = scmp.eq.s32.totalorder %s21, 1
      %p60 = scmp.ne.s32.totalorder %s55, %s57
      %p61 = scmp.eq.s32.totalorder %s21, 0
      %p62 = por %p60, %p61
      %p63 = scmp.ne.s32.totalorder %s55, %s57
      %p64 = scmp.eq.s32.totalorder %s26, 1
      %p65 = por %p63, %p64
      %p66 = scmp.ne.s32.totalorder %s57, %s58
      %p67 = scmp.eq.s32.totalorder %s26, 0
      %p68 = por %p66, %p67
      %p69 = scmp.ne.s32.totalorder %s57, %s58
      %p70 = scmp.eq.s32.totalorder %s27, 1
      %p71 = por %p69, %p70
      %p73 = scmp.ne.s32.totalorder %s58, %s72
      %p74 = scmp.eq.s32.totalorder %s27, 0
      %p75 = por %p73, %p74
      %s77 = sadd.s32 %s76, 1
      %p80 = scmp.eq.s32.totalorder %s21, 1
      %p81 = scmp.ne.s32.totalorder %s76, %s78
      %p82 = scmp.eq.s32.totalorder %s21, 0
      %p83 = por %p81, %p82
      %p84 = scmp.ne.s32.totalorder %s76, %s78
      %p85 = scmp.eq.s32.totalorder %s26, 1
      %p86 = por %p84, %p85
      %p87 = scmp.ne.s32.totalorder %s78, %s79
      %p88 = scmp.eq.s32.totalorder %s26, 0
      %p89 = por %p87, %p88
      %p90 = scmp.ne.s32.totalorder %s78, %s79
      %p91 = scmp.eq.s32.totalorder %s27, 1
      %p92 = por %p90, %p91
      %p94 = scmp.ne.s32.totalorder %s79, %s93
      %p95 = scmp.eq.s32.totalorder %s27, 0
      %p96 = por %p94, %p95
      %s98 = sadd.s32 %s97, 1
      %p101 = scmp.eq.s32.totalorder %s21, 1
      %p102 = scmp.ne.s32.totalorder %s97, %s99
      %p103 = scmp.eq.s32.totalorder %s21, 0
      %p104 = por %p102, %p103
      %p105 = scmp.ne.s32.totalorder %s97, %s99
      %p106 = scmp.eq.s32.totalorder %s26, 1
      %p107 = por %p105, %p106
      %p108 = scmp.ne.s32.totalorder %s99, %s100
      %p109 = scmp.eq.s32.totalorder %s26, 0
      %p110 = por %p108, %p109
      %p111 = scmp.ne.s32.totalorder %s99, %s100
      %p112 = scmp.eq.s32.totalorder %s27, 1
      %p113 = por %p111, %p112
      %p115 = scmp.ne.s32.totalorder %s100, %s114
      %p116 = scmp.eq.s32.totalorder %s27, 0
      %p117 = por %p115, %p116
      %s119 = sadd.s32 %s118, 1
      %p122 = scmp.eq.s32.totalorder %s21, 1
      %p123 = scmp.ne.s32.totalorder %s118, %s120
      %p124 = scmp.eq.s32.totalorder %s21, 0
      %p125 = por %p123, %p124
      %p126 = scmp.ne.s32.totalorder %s118, %s120
      %p127 = scmp.eq.s32.totalorder %s26, 1
      %p128 = por %p126, %p127
      %p129 = scmp.ne.s32.totalorder %s120, %s121
      %p130 = scmp.eq.s32.totalorder %s26, 0
      %p131 = por %p129, %p130
      %p132 = scmp.ne.s32.totalorder %s120, %s121
      %p133 = scmp.eq.s32.totalorder %s27, 1
      %p134 = por %p132, %p133
      %p136 = scmp.ne.s32.totalorder %s121, %s135
      %p137 = scmp.eq.s32.totalorder %s27, 0
      %p138 = por %p136, %p137
      %s140 = sadd.s32 %s139, 1
      %p143 = scmp.eq.s32.totalorder %s21, 1
      %p144 = scmp.ne.s32.totalorder %s139, %s141
      %p145 = scmp.eq.s32.totalorder %s21, 0
      %p146 = por %p144, %p145
      %p147 = scmp.ne.s32.totalorder %s139, %s141
      %p148 = scmp.eq.s32.totalorder %s26, 1
      %p149 = por %p147, %p148
      %p150 = scmp.ne.s32.totalorder %s141, %s142
      %p151 = scmp.eq.s32.totalorder %s26, 0
      %p152 = por %p150, %p151
      %p153 = scmp.ne.s32.totalorder %s141, %s142
      %p154 = scmp.eq.s32.totalorder %s27, 1
      %p155 = por %p153, %p154
      %p157 = scmp.ne.s32.totalorder %s142, %s156
      %p158 = scmp.eq.s32.totalorder %s27, 0
      %p159 = por %p157, %p158
      %s161 = sadd.s32 %s160, 1
      %p164 = scmp.eq.s32.totalorder %s21, 1
      %p165 = scmp.ne.s32.totalorder %s160, %s162
      %p166 = scmp.eq.s32.totalorder %s21, 0
      %p167 = por %p165, %p166
      %p168 = scmp.ne.s32.totalorder %s160, %s162
      %p169 = scmp.eq.s32.totalorder %s26, 1
      %p170 = por %p168, %p169
      %p171 = scmp.ne.s32.totalorder %s162, %s163
      %p172 = scmp.eq.s32.totalorder %s26, 0
      %p173 = por %p171, %p172
      %p174 = scmp.ne.s32.totalorder %s162, %s163
      %p175 = scmp.eq.s32.totalorder %s27, 1
      %p176 = por %p174, %p175
      %p178 = scmp.ne.s32.totalorder %s163, %s177
      %p179 = scmp.eq.s32.totalorder %s27, 0
      %p180 = por %p178, %p179
      %s181 = ssub.s32 %s21, %s28
      %p182 = scmp.eq.s32.totalorder %s181, 0
      %s184 = sadd.s32 %s183, 1
      %s185 = scalar_select %p182, %s183, %s184
      %p188 = pneg %p182
      %p189 = scmp.eq.s32.totalorder %s21, 1
      %p190 = por %p188, %p189
      %p191 = scmp.ne.s32.totalorder %s183, %s186
      %p192 = scmp.eq.s32.totalorder %s21, 0
      %p193 = por %p191, %p192
      %p194 = scmp.ne.s32.totalorder %s183, %s186
      %p195 = scmp.eq.s32.totalorder %s26, 1
      %p196 = por %p194, %p195
      %p197 = scmp.ne.s32.totalorder %s186, %s187
      %p198 = scmp.eq.s32.totalorder %s26, 0
      %p199 = por %p197, %p198
      %p200 = scmp.ne.s32.totalorder %s186, %s187
      %p201 = scmp.eq.s32.totalorder %s27, 1
      %p202 = por %p200, %p201
      %p204 = scmp.ne.s32.totalorder %s187, %s203
      %p205 = scmp.eq.s32.totalorder %s27, 0
      %p206 = por %p204, %p205
      %p207 = scmp.le.s32.totalorder 1, %s21
      %p208 = scmp.lt.s32.totalorder %s21, 3
      %p209 = pnand %p207, %p208
      %p210 = pneg %p209
      // Predicated region
      $region9: #{tpu_custom_call.1} parent=5 // pred_check
        _
      $region10: #{tpu_custom_call.1} parent=5 // pred_check_branch
        %212 = sbr.rel (%p209) target = $region12
      $region11: #{tpu_custom_call.1} parent=5 // pred_region
        %s213 = ssub.s32 %s21, 1
        // Predicated region
        $region13: #{tpu_custom_call.1} parent=11 // pred_check
          %p214 = pneg %p68
        $region14: #{tpu_custom_call.1} parent=11 // pred_check_branch
          %216 = sbr.rel (%p214) target = $region16
        $region15: #{tpu_custom_call.1} parent=11 // pred_region
          %s218 = ssub.s32 12288, 12288
          %219 = vsyncadd [#allocation10], %s218
          %s220 = sshll.u32 [#allocation9], 4
          %s221 = int_to_ptr.vmem [resolvable:$true] %s220
          %226 = dma.hbm_to_vmem [thread:$0]  %s1, 12288, %s221, [#allocation10], 256, 256, 16
        $region16: #{tpu_custom_call.1} parent=11 // pred_fallthru
          _
        // Predicated region
        $region17: #{tpu_custom_call.1} parent=11 // pred_check
          %p227 = pneg %p89
        $region18: #{tpu_custom_call.1} parent=11 // pred_check_branch
          %229 = sbr.rel (%p227) target = $region20
        $region19: #{tpu_custom_call.1} parent=11 // pred_region
          _
        $region20: #{tpu_custom_call.1} parent=11 // pred_fallthru
          _
        // Predicated region
        $region21: #{tpu_custom_call.1} parent=11 // pred_check
          %p230 = pneg %p110
        $region22: #{tpu_custom_call.1} parent=11 // pred_check_branch
          %232 = sbr.rel (%p230) target = $region24
        $region23: #{tpu_custom_call.1} parent=11 // pred_region
          %s234 = ssub.s32 12288, 12288
          %235 = vsyncadd [#allocation10], %s234
          %s236 = sshll.u32 [#allocation11], 4
          %s237 = int_to_ptr.vmem [resolvable:$true] %s236
          %242 = dma.hbm_to_vmem [thread:$0]  %s3, 12288, %s237, [#allocation10], 256, 256, 16
        $region24: #{tpu_custom_call.1} parent=11 // pred_fallthru
          _
        // Predicated region
        $region25: #{tpu_custom_call.1} parent=11 // pred_check
          %p243 = pneg %p131
        $region26: #{tpu_custom_call.1} parent=11 // pred_check_branch
          %245 = sbr.rel (%p243) target = $region28
        $region27: #{tpu_custom_call.1} parent=11 // pred_region
          _
        $region28: #{tpu_custom_call.1} parent=11 // pred_fallthru
          _
        // Predicated region
        $region29: #{tpu_custom_call.1} parent=11 // pred_check
          %p246 = pneg %p152
        $region30: #{tpu_custom_call.1} parent=11 // pred_check_branch
          %248 = sbr.rel (%p246) target = $region32
        $region31: #{tpu_custom_call.1} parent=11 // pred_region
          %s250 = ssub.s32 2048, 2048
          %251 = vsyncadd [#allocation13], %s250
          %s252 = sshll.u32 [#allocation12], 4
          %s253 = int_to_ptr.vmem [resolvable:$true] %s252
          %258 = dma.hbm_to_vmem [thread:$0]  %s5, 2048, %s253, [#allocation13], 128, 128, 8
        $region32: #{tpu_custom_call.1} parent=11 // pred_fallthru
          _
        // Predicated region
        $region33: #{tpu_custom_call.1} parent=11 // pred_check
          %p259 = pneg %p173
        $region34: #{tpu_custom_call.1} parent=11 // pred_check_branch
          %261 = sbr.rel (%p259) target = $region36
        $region35: #{tpu_custom_call.1} parent=11 // pred_region
          _
        $region36: #{tpu_custom_call.1} parent=11 // pred_fallthru
          _
      $region12: #{tpu_custom_call.1} parent=5 // pred_fallthru
        _
      %p262 = scmp.lt.s32.totalorder %s21, 2
      // Predicated region
      $region37: #{tpu_custom_call.1} parent=5 // pred_check
        %p263 = pneg %p262
      $region38: #{tpu_custom_call.1} parent=5 // pred_check_branch
        %265 = sbr.rel (%p263) target = $region40
      $region39: #{tpu_custom_call.1} parent=5 // pred_region
        // Predicated region
        $region41: #{tpu_custom_call.1} parent=39 // pred_check
          %p266 = pneg %p41
        $region42: #{tpu_custom_call.1} parent=39 // pred_check_branch
          %268 = sbr.rel (%p266) target = $region44
        $region43: #{tpu_custom_call.1} parent=39 // pred_region
          %s269 = sand.u32 %s31, 1
          %s270 = scalar_lea.sflag [#allocation7], %s269
          %s271 = sand.u32 %s31, 1
          %s272 = smul.addr %s271, 8
          %s273 = scalar_lea.vmem [#allocation6], %s272
          %s275 = ssub.s32 128, 128
          %276 = vsyncadd %s270, %s275
          %s277 = smul.addr %s21, 128
          %s278 = scalar_lea.hbm %s0, %s277
          %s280 = sshll.u32 %s273, 4
          %s281 = int_to_ptr.vmem [resolvable:$true] %s280
          %283 = dma.hbm_to_vmem [thread:$0]  %s278, 128, %s281, %s270
        $region44: #{tpu_custom_call.1} parent=39 // pred_fallthru
          _
      $region40: #{tpu_custom_call.1} parent=5 // pred_fallthru
        _
      %p284 = scmp.le.s32.totalorder 1, %s21
      %p285 = scmp.lt.s32.totalorder %s21, 3
      %p286 = pnand %p284, %p285
      %p287 = pneg %p286
      // Predicated region
      $region45: #{tpu_custom_call.1} parent=5 // pred_check
        _
      $region46: #{tpu_custom_call.1} parent=5 // pred_check_branch
        %289 = sbr.rel (%p286) target = $region48
      $region47: #{tpu_custom_call.1} parent=5 // pred_region
        %s290 = ssub.s32 %s21, 1
        %s291 = sand.u32 %s34, 1
        %s292 = scalar_lea.sflag [#allocation7], %s291
        %s293 = sand.u32 %s34, 1
        %s294 = smul.addr %s293, 8
        %s295 = scalar_lea.vmem [#allocation6], %s294
        // Predicated region
        $region49: #{tpu_custom_call.1} parent=47 // pred_check
          %p296 = pneg %p47
        $region50: #{tpu_custom_call.1} parent=47 // pred_check_branch
          %298 = sbr.rel (%p296) target = $region52
        $region51: #{tpu_custom_call.1} parent=47 // pred_region
          %299 = dma.done %s292, 128
        $region52: #{tpu_custom_call.1} parent=47 // pred_fallthru
          _
        // Predicated region
        $region53: #{tpu_custom_call.1} parent=47 // pred_check
          %p300 = pneg %p68
        $region54: #{tpu_custom_call.1} parent=47 // pred_check_branch
          %302 = sbr.rel (%p300) target = $region56
        $region55: #{tpu_custom_call.1} parent=47 // pred_region
          %303 = dma.done [#allocation10], 12288
        $region56: #{tpu_custom_call.1} parent=47 // pred_fallthru
          _
        // Predicated region
        $region57: #{tpu_custom_call.1} parent=47 // pred_check
          %p304 = pneg %p110
        $region58: #{tpu_custom_call.1} parent=47 // pred_check_branch
          %306 = sbr.rel (%p304) target = $region60
        $region59: #{tpu_custom_call.1} parent=47 // pred_region
          %307 = dma.done [#allocation10], 12288
        $region60: #{tpu_custom_call.1} parent=47 // pred_fallthru
          _
        // Predicated region
        $region61: #{tpu_custom_call.1} parent=47 // pred_check
          %p308 = pneg %p152
        $region62: #{tpu_custom_call.1} parent=47 // pred_check_branch
          %310 = sbr.rel (%p308) target = $region64
        $region63: #{tpu_custom_call.1} parent=47 // pred_region
          %311 = dma.done [#allocation13], 2048
        $region64: #{tpu_custom_call.1} parent=47 // pred_fallthru
          _
        %s312 = sand.u32 %s34, 1
        %s313 = scalar_lea.sflag [#allocation7], %s312
        %s314 = sand.u32 %s34, 1
        %s315 = smul.addr %s314, 8
        %s316 = scalar_lea.vmem [#allocation6], %s315
        %p317 = pneg %p47
        %p318 = pneg %p44
        %p319 = pneg %p68
        %p320 = pneg %p65
        %p321 = pneg %p89
        %p322 = pneg %p86
        %p323 = pneg %p110
        %p324 = pneg %p107
        %p325 = pneg %p131
        %p326 = pneg %p128
        %p327 = pneg %p152
        %p328 = pneg %p149
        %p329 = pneg %p173
        %p330 = pneg %p170
        %p331 = pneg %p199
        %p332 = pneg %p196
        %s333 = sand.u32 %s186, 1
        %s334 = scalar_lea.sflag [#allocation8], %s333
        %s335 = sand.u32 %s186, 1
        %s336 = smul.addr %s335, 2
        %s337 = scalar_lea.vmem [#allocation14], %s336
        %338 = vst [vmem:[#allocation2] sm:$0xff] 0.0
        %339 = vst [vmem:[#allocation2 + $0x8] sm:$0x3] 0.0
        %v340 = vld [vmem:[%s295] sm:$0xff]
        %vm341 = vcmask 130048
        %342 = vst.msk [vmem:[#allocation2 + $0x1] sm:$0xff] %vm341, %v340
        %v343 = vld [vmem:[#allocation2] sm:$0xff]
        %v344 = vld [vmem:[#allocation9] sm:$0xff]
        %v345 = vld [vmem:[#allocation9 + $0x8] sm:$0xff]
        %v346 = vld [vmem:[#allocation9 + $0x10] sm:$0xff]
        %v347 = vld [vmem:[#allocation9 + $0x18] sm:$0xff]
        %v348 = vld [vmem:[#allocation9 + $0x20] sm:$0xff]
        %v349 = vld [vmem:[#allocation9 + $0x28] sm:$0xff]
        %v350 = vld [vmem:[#allocation9 + $0x30] sm:$0xff]
        %v351 = vld [vmem:[#allocation9 + $0x38] sm:$0xff]
        %v352 = vld [vmem:[#allocation9 + $0x40] sm:$0xff]
        %v353 = vld [vmem:[#allocation9 + $0x48] sm:$0xff]
        %v354 = vld [vmem:[#allocation9 + $0x50] sm:$0xff]
        %v355 = vld [vmem:[#allocation9 + $0x58] sm:$0xff]
        %v356 = vld [vmem:[#allocation9 + $0x60] sm:$0xff]
        %v357 = vld [vmem:[#allocation9 + $0x68] sm:$0xff]
        %v358 = vld [vmem:[#allocation9 + $0x70] sm:$0xff]
        %v359 = vld [vmem:[#allocation9 + $0x78] sm:$0xff]
        %v360 = vld [vmem:[#allocation9 + $0x80] sm:$0xff]
        %v361 = vld [vmem:[#allocation9 + $0x88] sm:$0xff]
        %v362 = vld [vmem:[#allocation9 + $0x90] sm:$0xff]
        %v363 = vld [vmem:[#allocation9 + $0x98] sm:$0xff]
        %v364 = vld [vmem:[#allocation9 + $0xa0] sm:$0xff]
        %v365 = vld [vmem:[#allocation9 + $0xa8] sm:$0xff]
        %v366 = vld [vmem:[#allocation9 + $0xb0] sm:$0xff]
        %v367 = vld [vmem:[#allocation9 + $0xb8] sm:$0xff]
        %v368 = vld [vmem:[#allocation9 + $0xc0] sm:$0xff]
        %v369 = vld [vmem:[#allocation9 + $0xc8] sm:$0xff]
        %v370 = vld [vmem:[#allocation9 + $0xd0] sm:$0xff]
        %v371 = vld [vmem:[#allocation9 + $0xd8] sm:$0xff]
        %v372 = vld [vmem:[#allocation9 + $0xe0] sm:$0xff]
        %v373 = vld [vmem:[#allocation9 + $0xe8] sm:$0xff]
        %v374 = vld [vmem:[#allocation9 + $0xf0] sm:$0xff]
        %v375 = vld [vmem:[#allocation9 + $0xf8] sm:$0xff]
        %v376 = vld [vmem:[#allocation2 + $0x1] sm:$0xff]
        %s377 = scalar_lea.vmem [#allocation9], 256
        %v378 = vld [vmem:[%s377] sm:$0xff]
        %v379 = vld [vmem:[%s377 + $0x8] sm:$0xff]
        %v380 = vld [vmem:[%s377 + $0x10] sm:$0xff]
        %v381 = vld [vmem:[%s377 + $0x18] sm:$0xff]
        %v382 = vld [vmem:[%s377 + $0x20] sm:$0xff]
        %v383 = vld [vmem:[%s377 + $0x28] sm:$0xff]
        %v384 = vld [vmem:[%s377 + $0x30] sm:$0xff]
        %v385 = vld [vmem:[%s377 + $0x38] sm:$0xff]
        %v386 = vld [vmem:[%s377 + $0x40] sm:$0xff]
        %v387 = vld [vmem:[%s377 + $0x48] sm:$0xff]
        %v388 = vld [vmem:[%s377 + $0x50] sm:$0xff]
        %v389 = vld [vmem:[%s377 + $0x58] sm:$0xff]
        %v390 = vld [vmem:[%s377 + $0x60] sm:$0xff]
        %v391 = vld [vmem:[%s377 + $0x68] sm:$0xff]
        %v392 = vld [vmem:[%s377 + $0x70] sm:$0xff]
        %v393 = vld [vmem:[%s377 + $0x78] sm:$0xff]
        %v394 = vld [vmem:[%s377 + $0x80] sm:$0xff]
        %v395 = vld [vmem:[%s377 + $0x88] sm:$0xff]
        %v396 = vld [vmem:[%s377 + $0x90] sm:$0xff]
        %v397 = vld [vmem:[%s377 + $0x98] sm:$0xff]
        %v398 = vld [vmem:[%s377 + $0xa0] sm:$0xff]
        %v399 = vld [vmem:[%s377 + $0xa8] sm:$0xff]
        %v400 = vld [vmem:[%s377 + $0xb0] sm:$0xff]
        %v401 = vld [vmem:[%s377 + $0xb8] sm:$0xff]
        %v402 = vld [vmem:[%s377 + $0xc0] sm:$0xff]
        %v403 = vld [vmem:[%s377 + $0xc8] sm:$0xff]
        %v404 = vld [vmem:[%s377 + $0xd0] sm:$0xff]
        %v405 = vld [vmem:[%s377 + $0xd8] sm:$0xff]
        %v406 = vld [vmem:[%s377 + $0xe0] sm:$0xff]
        %v407 = vld [vmem:[%s377 + $0xe8] sm:$0xff]
        %v408 = vld [vmem:[%s377 + $0xf0] sm:$0xff]
        %v409 = vld [vmem:[%s377 + $0xf8] sm:$0xff]
        %410 = vmatprep.subr.mxu0 %v379
        %411 = vmatpush1.msra.mxu0 %v378
        %412 = vmatprep.subr.mxu0 %v381
        %413 = vmatpush1.msra.mxu0 %v380
        %414 = vmatprep.subr.mxu0 %v383
        %415 = vmatpush1.msra.mxu0 %v382
        %416 = vmatprep.subr.mxu0 %v385
        %417 = vmatpush1.msra.mxu0 %v384
        %418 = vmatprep.subr.mxu0 %v387
        %419 = vmatpush1.msra.mxu0 %v386
        %420 = vmatprep.subr.mxu0 %v389
        %421 = vmatpush1.msra.mxu0 %v388
        %422 = vmatprep.subr.mxu0 %v391
        %423 = vmatpush1.msra.mxu0 %v390
        %424 = vmatprep.subr.mxu0 %v393
        %425 = vmatpush1.msra.mxu0 %v392
        %426 = vmatprep.subr.mxu0 %v395
        %427 = vmatpush1.msra.mxu0 %v394
        %428 = vmatprep.subr.mxu0 %v397
        %429 = vmatpush1.msra.mxu0 %v396
        %430 = vmatprep.subr.mxu0 %v399
        %431 = vmatpush1.msra.mxu0 %v398
        %432 = vmatprep.subr.mxu0 %v401
        %433 = vmatpush1.msra.mxu0 %v400
        %434 = vmatprep.subr.mxu0 %v403
        %435 = vmatpush1.msra.mxu0 %v402
        %436 = vmatprep.subr.mxu0 %v405
        %437 = vmatpush1.msra.mxu0 %v404
        %438 = vmatprep.subr.mxu0 %v407
        %439 = vmatpush1.msra.mxu0 %v406
        %440 = vmatprep.subr.mxu0 %v409
        %441 = vmatpush1.msra.mxu0 %v408
        %442 = vmatprep.subr.mxu0 0.0
        %443 = vmatpush1.msra.mxu0 0.0
        %444 = vmatprep.subr.mxu0 0.0
        %445 = vmatpush1.msra.mxu0 0.0
        %446 = vmatprep.subr.mxu0 0.0
        %447 = vmatpush1.msra.mxu0 0.0
        %448 = vmatprep.subr.mxu0 0.0
        %449 = vmatpush1.msra.mxu0 0.0
        %450 = vmatprep.subr.mxu0 0.0
        %451 = vmatpush1.msra.mxu0 0.0
        %452 = vmatprep.subr.mxu0 0.0
        %453 = vmatpush1.msra.mxu0 0.0
        %454 = vmatprep.subr.mxu0 0.0
        %455 = vmatpush1.msra.mxu0 0.0
        %456 = vmatprep.subr.mxu0 0.0
        %457 = vmatpush1.msra.mxu0 0.0
        %458 = vmatprep.subr.mxu0 0.0
        %459 = vmatpush1.msra.mxu0 0.0
        %460 = vmatprep.subr.mxu0 0.0
        %461 = vmatpush1.msra.mxu0 0.0
        %462 = vmatprep.subr.mxu0 0.0
        %463 = vmatpush1.msra.mxu0 0.0
        %464 = vmatprep.subr.mxu0 0.0
        %465 = vmatpush1.msra.mxu0 0.0
        %466 = vmatprep.subr.mxu0 0.0
        %467 = vmatpush1.msra.mxu0 0.0
        %468 = vmatprep.subr.mxu0 0.0
        %469 = vmatpush1.msra.mxu0 0.0
        %470 = vmatprep.subr.mxu0 0.0
        %471 = vmatpush1.msra.mxu0 0.0
        %472 = vmatprep.subr.mxu0 0.0
        %473 = vmatpush1.msra.mxu0 0.0
        %474 = vmatprep.mubr.f32.mxu0 0.0
        %475 = vmatmul.mubr.f32.gmra.mrb[0].mxu0 %v376
        %v476 = vpop.f32.mrb[0].mxu0
        %v477 = vadd.f32 0.0, %v476
        %v478 = vpop.f32.mrb[0].mxu0
        %v479 = vadd.f32 0.0, %v478
        %480 = vdwg.mxu0
        %481 = vmatprep.subr.mxu0 %v345
        %482 = vmatpush1.msra.mxu0 %v344
        %483 = vmatprep.subr.mxu0 %v347
        %484 = vmatpush1.msra.mxu0 %v346
        %485 = vmatprep.subr.mxu0 %v349
        %486 = vmatpush1.msra.mxu0 %v348
        %487 = vmatprep.subr.mxu0 %v351
        %488 = vmatpush1.msra.mxu0 %v350
        %489 = vmatprep.subr.mxu0 %v353
        %490 = vmatpush1.msra.mxu0 %v352
        %491 = vmatprep.subr.mxu0 %v355
        %492 = vmatpush1.msra.mxu0 %v354
        %493 = vmatprep.subr.mxu0 %v357
        %494 = vmatpush1.msra.mxu0 %v356
        %495 = vmatprep.subr.mxu0 %v359
        %496 = vmatpush1.msra.mxu0 %v358
        %497 = vmatprep.subr.mxu0 %v361
        %498 = vmatpush1.msra.mxu0 %v360
        %499 = vmatprep.subr.mxu0 %v363
        %500 = vmatpush1.msra.mxu0 %v362
        %501 = vmatprep.subr.mxu0 %v365
        %502 = vmatpush1.msra.mxu0 %v364
        %503 = vmatprep.subr.mxu0 %v367
        %504 = vmatpush1.msra.mxu0 %v366
        %505 = vmatprep.subr.mxu0 %v369
        %506 = vmatpush1.msra.mxu0 %v368
        %507 = vmatprep.subr.mxu0 %v371
        %508 = vmatpush1.msra.mxu0 %v370
        %509 = vmatprep.subr.mxu0 %v373
        %510 = vmatpush1.msra.mxu0 %v372
        %511 = vmatprep.subr.mxu0 %v375
        %512 = vmatpush1.msra.mxu0 %v374
        %513 = vmatprep.subr.mxu0 0.0
        %514 = vmatpush1.msra.mxu0 0.0
        %515 = vmatprep.subr.mxu0 0.0
        %516 = vmatpush1.msra.mxu0 0.0
        %517 = vmatprep.subr.mxu0 0.0
        %518 = vmatpush1.msra.mxu0 0.0
        %519 = vmatprep.subr.mxu0 0.0
        %520 = vmatpush1.msra.mxu0 0.0
        %521 = vmatprep.subr.mxu0 0.0
        %522 = vmatpush1.msra.mxu0 0.0
        %523 = vmatprep.subr.mxu0 0.0
        %524 = vmatpush1.msra.mxu0 0.0
        %525 = vmatprep.subr.mxu0 0.0
        %526 = vmatpush1.msra.mxu0 0.0
        %527 = vmatprep.subr.mxu0 0.0
        %528 = vmatpush1.msra.mxu0 0.0
        %529 = vmatprep.subr.mxu0 0.0
        %530 = vmatpush1.msra.mxu0 0.0
        %531 = vmatprep.subr.mxu0 0.0
        %532 = vmatpush1.msra.mxu0 0.0
        %533 = vmatprep.subr.mxu0 0.0
        %534 = vmatpush1.msra.mxu0 0.0
        %535 = vmatprep.subr.mxu0 0.0
        %536 = vmatpush1.msra.mxu0 0.0
        %537 = vmatprep.subr.mxu0 0.0
        %538 = vmatpush1.msra.mxu0 0.0
        %539 = vmatprep.subr.mxu0 0.0
        %540 = vmatpush1.msra.mxu0 0.0
        %541 = vmatprep.subr.mxu0 0.0
        %542 = vmatpush1.msra.mxu0 0.0
        %543 = vmatprep.subr.mxu0 0.0
        %544 = vmatpush1.msra.mxu0 0.0
        %545 = vmatprep.mubr.f32.mxu0 0.0
        %546 = vmatmul.mubr.f32.gmra.mrb[0].mxu0 %v343
        %v547 = vpop.f32.mrb[0].mxu0
        %v548 = vadd.f32 %v477, %v547
        %v549 = vpop.f32.mrb[0].mxu0
        %v550 = vadd.f32 %v479, %v549
        %551 = vdwg.mxu0
        %v552 = vld [vmem:[#allocation2 + $0x2] sm:$0xff]
        %s553 = scalar_lea.vmem [#allocation9], 512
        %v554 = vld [vmem:[%s553] sm:$0xff]
        %v555 = vld [vmem:[%s553 + $0x8] sm:$0xff]
        %v556 = vld [vmem:[%s553 + $0x10] sm:$0xff]
        %v557 = vld [vmem:[%s553 + $0x18] sm:$0xff]
        %v558 = vld [vmem:[%s553 + $0x20] sm:$0xff]
        %v559 = vld [vmem:[%s553 + $0x28] sm:$0xff]
        %v560 = vld [vmem:[%s553 + $0x30] sm:$0xff]
        %v561 = vld [vmem:[%s553 + $0x38] sm:$0xff]
        %v562 = vld [vmem:[%s553 + $0x40] sm:$0xff]
        %v563 = vld [vmem:[%s553 + $0x48] sm:$0xff]
        %v564 = vld [vmem:[%s553 + $0x50] sm:$0xff]
        %v565 = vld [vmem:[%s553 + $0x58] sm:$0xff]
        %v566 = vld [vmem:[%s553 + $0x60] sm:$0xff]
        %v567 = vld [vmem:[%s553 + $0x68] sm:$0xff]
        %v568 = vld [vmem:[%s553 + $0x70] sm:$0xff]
        %v569 = vld [vmem:[%s553 + $0x78] sm:$0xff]
        %v570 = vld [vmem:[%s553 + $0x80] sm:$0xff]
        %v571 = vld [vmem:[%s553 + $0x88] sm:$0xff]
        %v572 = vld [vmem:[%s553 + $0x90] sm:$0xff]
        %v573 = vld [vmem:[%s553 + $0x98] sm:$0xff]
        %v574 = vld [vmem:[%s553 + $0xa0] sm:$0xff]
        %v575 = vld [vmem:[%s553 + $0xa8] sm:$0xff]
        %v576 = vld [vmem:[%s553 + $0xb0] sm:$0xff]
        %v577 = vld [vmem:[%s553 + $0xb8] sm:$0xff]
        %v578 = vld [vmem:[%s553 + $0xc0] sm:$0xff]
        %v579 = vld [vmem:[%s553 + $0xc8] sm:$0xff]
        %v580 = vld [vmem:[%s553 + $0xd0] sm:$0xff]
        %v581 = vld [vmem:[%s553 + $0xd8] sm:$0xff]
        %v582 = vld [vmem:[%s553 + $0xe0] sm:$0xff]
        %v583 = vld [vmem:[%s553 + $0xe8] sm:$0xff]
        %v584 = vld [vmem:[%s553 + $0xf0] sm:$0xff]
        %v585 = vld [vmem:[%s553 + $0xf8] sm:$0xff]
        %586 = vmatprep.subr.mxu0 %v555
        %587 = vmatpush1.msra.mxu0 %v554
        %588 = vmatprep.subr.mxu0 %v557
        %589 = vmatpush1.msra.mxu0 %v556
        %590 = vmatprep.subr.mxu0 %v559
        %591 = vmatpush1.msra.mxu0 %v558
        %592 = vmatprep.subr.mxu0 %v561
        %593 = vmatpush1.msra.mxu0 %v560
        %594 = vmatprep.subr.mxu0 %v563
        %595 = vmatpush1.msra.mxu0 %v562
        %596 = vmatprep.subr.mxu0 %v565
        %597 = vmatpush1.msra.mxu0 %v564
        %598 = vmatprep.subr.mxu0 %v567
        %599 = vmatpush1.msra.mxu0 %v566
        %600 = vmatprep.subr.mxu0 %v569
        %601 = vmatpush1.msra.mxu0 %v568
        %602 = vmatprep.subr.mxu0 %v571
        %603 = vmatpush1.msra.mxu0 %v570
        %604 = vmatprep.subr.mxu0 %v573
        %605 = vmatpush1.msra.mxu0 %v572
        %606 = vmatprep.subr.mxu0 %v575
        %607 = vmatpush1.msra.mxu0 %v574
        %608 = vmatprep.subr.mxu0 %v577
        %609 = vmatpush1.msra.mxu0 %v576
        %610 = vmatprep.subr.mxu0 %v579
        %611 = vmatpush1.msra.mxu0 %v578
        %612 = vmatprep.subr.mxu0 %v581
        %613 = vmatpush1.msra.mxu0 %v580
        %614 = vmatprep.subr.mxu0 %v583
        %615 = vmatpush1.msra.mxu0 %v582
        %616 = vmatprep.subr.mxu0 %v585
        %617 = vmatpush1.msra.mxu0 %v584
        %618 = vmatprep.subr.mxu0 0.0
        %619 = vmatpush1.msra.mxu0 0.0
        %620 = vmatprep.subr.mxu0 0.0
        %621 = vmatpush1.msra.mxu0 0.0
        %622 = vmatprep.subr.mxu0 0.0
        %623 = vmatpush1.msra.mxu0 0.0
        %624 = vmatprep.subr.mxu0 0.0
        %625 = vmatpush1.msra.mxu0 0.0
        %626 = vmatprep.subr.mxu0 0.0
        %627 = vmatpush1.msra.mxu0 0.0
        %628 = vmatprep.subr.mxu0 0.0
        %629 = vmatpush1.msra.mxu0 0.0
        %630 = vmatprep.subr.mxu0 0.0
        %631 = vmatpush1.msra.mxu0 0.0
        %632 = vmatprep.subr.mxu0 0.0
        %633 = vmatpush1.msra.mxu0 0.0
        %634 = vmatprep.subr.mxu0 0.0
        %635 = vmatpush1.msra.mxu0 0.0
        %636 = vmatprep.subr.mxu0 0.0
        %637 = vmatpush1.msra.mxu0 0.0
        %638 = vmatprep.subr.mxu0 0.0
        %639 = vmatpush1.msra.mxu0 0.0
        %640 = vmatprep.subr.mxu0 0.0
        %641 = vmatpush1.msra.mxu0 0.0
        %642 = vmatprep.subr.mxu0 0.0
        %643 = vmatpush1.msra.mxu0 0.0
        %644 = vmatprep.subr.mxu0 0.0
        %645 = vmatpush1.msra.mxu0 0.0
        %646 = vmatprep.subr.mxu0 0.0
        %647 = vmatpush1.msra.mxu0 0.0
        %648 = vmatprep.subr.mxu0 0.0
        %649 = vmatpush1.msra.mxu0 0.0
        %650 = vmatprep.mubr.f32.mxu0 0.0
        %651 = vmatmul.mubr.f32.gmra.mrb[0].mxu0 %v552
        %v652 = vpop.f32.mrb[0].mxu0
        %v653 = vadd.f32 0.0, %v652
        %v654 = vpop.f32.mrb[0].mxu0
        %v655 = vadd.f32 0.0, %v654
        %656 = vdwg.mxu0
        %v657 = vadd.f32 %v548, %v653
        %v658 = vadd.f32 %v550, %v655
        %v659 = vmax.f32 %v657, %v658
        %v660 = vld [vmem:[%s2] sm:$0x1]
        %v662 = vlaneseq
        %v663 = vshrl.u32 %v662, 7
        %v664 = vsub.s32 0, %v663
        %v665 = vrot.slane %v660, %v664
        %v667 = vadd.f32 %v659, %v665
        %v668 = vmax.f32 %v667, 0.0
        %669 = vst [vmem:[#allocation4] sm:$0xff] %v668
        %v670 = vld [vmem:[#allocation4] ss:$2 sm:$0xf]
        %s671 = scalar_lea.vmem [#allocation4], 1
        %v672 = vld [vmem:[%s671] ss:$2 sm:$0xf]
        %v673 = vmax.f32 %v670, %v672
        %674 = vst [vmem:[#allocation3] sm:$0x1] 0.0
        %675 = vst [vmem:[#allocation3 + $0x5] sm:$0x1] 0.0
        %676 = vst [vmem:[#allocation3 + $0x1] sm:$0xf] %v673
        %v677 = vld [vmem:[#allocation3] sm:$0xf]
        %v678 = vld [vmem:[#allocation11] sm:$0xff]
        %v679 = vld [vmem:[#allocation11 + $0x8] sm:$0xff]
        %v680 = vld [vmem:[#allocation11 + $0x10] sm:$0xff]
        %v681 = vld [vmem:[#allocation11 + $0x18] sm:$0xff]
        %v682 = vld [vmem:[#allocation11 + $0x20] sm:$0xff]
        %v683 = vld [vmem:[#allocation11 + $0x28] sm:$0xff]
        %v684 = vld [vmem:[#allocation11 + $0x30] sm:$0xff]
        %v685 = vld [vmem:[#allocation11 + $0x38] sm:$0xff]
        %v686 = vld [vmem:[#allocation11 + $0x40] sm:$0xff]
        %v687 = vld [vmem:[#allocation11 + $0x48] sm:$0xff]
        %v688 = vld [vmem:[#allocation11 + $0x50] sm:$0xff]
        %v689 = vld [vmem:[#allocation11 + $0x58] sm:$0xff]
        %v690 = vld [vmem:[#allocation11 + $0x60] sm:$0xff]
        %v691 = vld [vmem:[#allocation11 + $0x68] sm:$0xff]
        %v692 = vld [vmem:[#allocation11 + $0x70] sm:$0xff]
        %v693 = vld [vmem:[#allocation11 + $0x78] sm:$0xff]
        %v694 = vld [vmem:[#allocation11 + $0x80] sm:$0xff]
        %v695 = vld [vmem:[#allocation11 + $0x88] sm:$0xff]
        %v696 = vld [vmem:[#allocation11 + $0x90] sm:$0xff]
        %v697 = vld [vmem:[#allocation11 + $0x98] sm:$0xff]
        %v698 = vld [vmem:[#allocation11 + $0xa0] sm:$0xff]
        %v699 = vld [vmem:[#allocation11 + $0xa8] sm:$0xff]
        %v700 = vld [vmem:[#allocation11 + $0xb0] sm:$0xff]
        %v701 = vld [vmem:[#allocation11 + $0xb8] sm:$0xff]
        %v702 = vld [vmem:[#allocation11 + $0xc0] sm:$0xff]
        %v703 = vld [vmem:[#allocation11 + $0xc8] sm:$0xff]
        %v704 = vld [vmem:[#allocation11 + $0xd0] sm:$0xff]
        %v705 = vld [vmem:[#allocation11 + $0xd8] sm:$0xff]
        %v706 = vld [vmem:[#allocation11 + $0xe0] sm:$0xff]
        %v707 = vld [vmem:[#allocation11 + $0xe8] sm:$0xff]
        %v708 = vld [vmem:[#allocation11 + $0xf0] sm:$0xff]
        %v709 = vld [vmem:[#allocation11 + $0xf8] sm:$0xff]
        %v710 = vld [vmem:[#allocation3 + $0x1] sm:$0xf]
        %s711 = scalar_lea.vmem [#allocation11], 256
        %v712 = vld [vmem:[%s711] sm:$0xff]
        %v713 = vld [vmem:[%s711 + $0x8] sm:$0xff]
        %v714 = vld [vmem:[%s711 + $0x10] sm:$0xff]
        %v715 = vld [vmem:[%s711 + $0x18] sm:$0xff]
        %v716 = vld [vmem:[%s711 + $0x20] sm:$0xff]
        %v717 = vld [vmem:[%s711 + $0x28] sm:$0xff]
        %v718 = vld [vmem:[%s711 + $0x30] sm:$0xff]
        %v719 = vld [vmem:[%s711 + $0x38] sm:$0xff]
        %v720 = vld [vmem:[%s711 + $0x40] sm:$0xff]
        %v721 = vld [vmem:[%s711 + $0x48] sm:$0xff]
        %v722 = vld [vmem:[%s711 + $0x50] sm:$0xff]
        %v723 = vld [vmem:[%s711 + $0x58] sm:$0xff]
        %v724 = vld [vmem:[%s711 + $0x60] sm:$0xff]
        %v725 = vld [vmem:[%s711 + $0x68] sm:$0xff]
        %v726 = vld [vmem:[%s711 + $0x70] sm:$0xff]
        %v727 = vld [vmem:[%s711 + $0x78] sm:$0xff]
        %v728 = vld [vmem:[%s711 + $0x80] sm:$0xff]
        %v729 = vld [vmem:[%s711 + $0x88] sm:$0xff]
        %v730 = vld [vmem:[%s711 + $0x90] sm:$0xff]
        %v731 = vld [vmem:[%s711 + $0x98] sm:$0xff]
        %v732 = vld [vmem:[%s711 + $0xa0] sm:$0xff]
        %v733 = vld [vmem:[%s711 + $0xa8] sm:$0xff]
        %v734 = vld [vmem:[%s711 + $0xb0] sm:$0xff]
        %v735 = vld [vmem:[%s711 + $0xb8] sm:$0xff]
        %v736 = vld [vmem:[%s711 + $0xc0] sm:$0xff]
        %v737 = vld [vmem:[%s711 + $0xc8] sm:$0xff]
        %v738 = vld [vmem:[%s711 + $0xd0] sm:$0xff]
        %v739 = vld [vmem:[%s711 + $0xd8] sm:$0xff]
        %v740 = vld [vmem:[%s711 + $0xe0] sm:$0xff]
        %v741 = vld [vmem:[%s711 + $0xe8] sm:$0xff]
        %v742 = vld [vmem:[%s711 + $0xf0] sm:$0xff]
        %v743 = vld [vmem:[%s711 + $0xf8] sm:$0xff]
        %744 = vmatprep.subr.mxu0 %v713
        %745 = vmatpush1.msra.mxu0 %v712
        %746 = vmatprep.subr.mxu0 %v715
        %747 = vmatpush1.msra.mxu0 %v714
        %748 = vmatprep.subr.mxu0 %v717
        %749 = vmatpush1.msra.mxu0 %v716
        %750 = vmatprep.subr.mxu0 %v719
        %751 = vmatpush1.msra.mxu0 %v718
        %752 = vmatprep.subr.mxu0 %v721
        %753 = vmatpush1.msra.mxu0 %v720
        %754 = vmatprep.subr.mxu0 %v723
        %755 = vmatpush1.msra.mxu0 %v722
        %756 = vmatprep.subr.mxu0 %v725
        %757 = vmatpush1.msra.mxu0 %v724
        %758 = vmatprep.subr.mxu0 %v727
        %759 = vmatpush1.msra.mxu0 %v726
        %760 = vmatprep.subr.mxu0 %v729
        %761 = vmatpush1.msra.mxu0 %v728
        %762 = vmatprep.subr.mxu0 %v731
        %763 = vmatpush1.msra.mxu0 %v730
        %764 = vmatprep.subr.mxu0 %v733
        %765 = vmatpush1.msra.mxu0 %v732
        %766 = vmatprep.subr.mxu0 %v735
        %767 = vmatpush1.msra.mxu0 %v734
        %768 = vmatprep.subr.mxu0 %v737
        %769 = vmatpush1.msra.mxu0 %v736
        %770 = vmatprep.subr.mxu0 %v739
        %771 = vmatpush1.msra.mxu0 %v738
        %772 = vmatprep.subr.mxu0 %v741
        %773 = vmatpush1.msra.mxu0 %v740
        %774 = vmatprep.subr.mxu0 %v743
        %775 = vmatpush1.msra.mxu0 %v742
        %776 = vmatprep.subr.mxu0 0.0
        %777 = vmatpush1.msra.mxu0 0.0
        %778 = vmatprep.subr.mxu0 0.0
        %779 = vmatpush1.msra.mxu0 0.0
        %780 = vmatprep.subr.mxu0 0.0
        %781 = vmatpush1.msra.mxu0 0.0
        %782 = vmatprep.subr.mxu0 0.0
        %783 = vmatpush1.msra.mxu0 0.0
        %784 = vmatprep.subr.mxu0 0.0
        %785 = vmatpush1.msra.mxu0 0.0
        %786 = vmatprep.subr.mxu0 0.0
        %787 = vmatpush1.msra.mxu0 0.0
        %788 = vmatprep.subr.mxu0 0.0
        %789 = vmatpush1.msra.mxu0 0.0
        %790 = vmatprep.subr.mxu0 0.0
        %791 = vmatpush1.msra.mxu0 0.0
        %792 = vmatprep.subr.mxu0 0.0
        %793 = vmatpush1.msra.mxu0 0.0
        %794 = vmatprep.subr.mxu0 0.0
        %795 = vmatpush1.msra.mxu0 0.0
        %796 = vmatprep.subr.mxu0 0.0
        %797 = vmatpush1.msra.mxu0 0.0
        %798 = vmatprep.subr.mxu0 0.0
        %799 = vmatpush1.msra.mxu0 0.0
        %800 = vmatprep.subr.mxu0 0.0
        %801 = vmatpush1.msra.mxu0 0.0
        %802 = vmatprep.subr.mxu0 0.0
        %803 = vmatpush1.msra.mxu0 0.0
        %804 = vmatprep.subr.mxu0 0.0
        %805 = vmatpush1.msra.mxu0 0.0
        %806 = vmatprep.subr.mxu0 0.0
        %807 = vmatpush1.msra.mxu0 0.0
        %808 = vmatprep.mubr.f32.mxu0 0.0
        %809 = vmatmul.mubr.f32.gmra.mrb[0].mxu0 %v710
        %v810 = vpop.f32.mrb[0].mxu0
        %v811 = vadd.f32 0.0, %v810
        %v812 = vpop.f32.mrb[0].mxu0
        %v813 = vadd.f32 0.0, %v812
        %814 = vdwg.mxu0
        %815 = vmatprep.subr.mxu0 %v679
        %816 = vmatpush1.msra.mxu0 %v678
        %817 = vmatprep.subr.mxu0 %v681
        %818 = vmatpush1.msra.mxu0 %v680
        %819 = vmatprep.subr.mxu0 %v683
        %820 = vmatpush1.msra.mxu0 %v682
        %821 = vmatprep.subr.mxu0 %v685
        %822 = vmatpush1.msra.mxu0 %v684
        %823 = vmatprep.subr.mxu0 %v687
        %824 = vmatpush1.msra.mxu0 %v686
        %825 = vmatprep.subr.mxu0 %v689
        %826 = vmatpush1.msra.mxu0 %v688
        %827 = vmatprep.subr.mxu0 %v691
        %828 = vmatpush1.msra.mxu0 %v690
        %829 = vmatprep.subr.mxu0 %v693
        %830 = vmatpush1.msra.mxu0 %v692
        %831 = vmatprep.subr.mxu0 %v695
        %832 = vmatpush1.msra.mxu0 %v694
        %833 = vmatprep.subr.mxu0 %v697
        %834 = vmatpush1.msra.mxu0 %v696
        %835 = vmatprep.subr.mxu0 %v699
        %836 = vmatpush1.msra.mxu0 %v698
        %837 = vmatprep.subr.mxu0 %v701
        %838 = vmatpush1.msra.mxu0 %v700
        %839 = vmatprep.subr.mxu0 %v703
        %840 = vmatpush1.msra.mxu0 %v702
        %841 = vmatprep.subr.mxu0 %v705
        %842 = vmatpush1.msra.mxu0 %v704
        %843 = vmatprep.subr.mxu0 %v707
        %844 = vmatpush1.msra.mxu0 %v706
        %845 = vmatprep.subr.mxu0 %v709
        %846 = vmatpush1.msra.mxu0 %v708
        %847 = vmatprep.subr.mxu0 0.0
        %848 = vmatpush1.msra.mxu0 0.0
        %849 = vmatprep.subr.mxu0 0.0
        %850 = vmatpush1.msra.mxu0 0.0
        %851 = vmatprep.subr.mxu0 0.0
        %852 = vmatpush1.msra.mxu0 0.0
        %853 = vmatprep.subr.mxu0 0.0
        %854 = vmatpush1.msra.mxu0 0.0
        %855 = vmatprep.subr.mxu0 0.0
        %856 = vmatpush1.msra.mxu0 0.0
        %857 = vmatprep.subr.mxu0 0.0
        %858 = vmatpush1.msra.mxu0 0.0
        %859 = vmatprep.subr.mxu0 0.0
        %860 = vmatpush1.msra.mxu0 0.0
        %861 = vmatprep.subr.mxu0 0.0
        %862 = vmatpush1.msra.mxu0 0.0
        %863 = vmatprep.subr.mxu0 0.0
        %864 = vmatpush1.msra.mxu0 0.0
        %865 = vmatprep.subr.mxu0 0.0
        %866 = vmatpush1.msra.mxu0 0.0
        %867 = vmatprep.subr.mxu0 0.0
        %868 = vmatpush1.msra.mxu0 0.0
        %869 = vmatprep.subr.mxu0 0.0
        %870 = vmatpush1.msra.mxu0 0.0
        %871 = vmatprep.subr.mxu0 0.0
        %872 = vmatpush1.msra.mxu0 0.0
        %873 = vmatprep.subr.mxu0 0.0
        %874 = vmatpush1.msra.mxu0 0.0
        %875 = vmatprep.subr.mxu0 0.0
        %876 = vmatpush1.msra.mxu0 0.0
        %877 = vmatprep.subr.mxu0 0.0
        %878 = vmatpush1.msra.mxu0 0.0
        %879 = vmatprep.mubr.f32.mxu0 0.0
        %880 = vmatmul.mubr.f32.gmra.mrb[0].mxu0 %v677
        %v881 = vpop.f32.mrb[0].mxu0
        %v882 = vadd.f32 %v811, %v881
        %v883 = vpop.f32.mrb[0].mxu0
        %v884 = vadd.f32 %v813, %v883
        %885 = vdwg.mxu0
        %v886 = vld [vmem:[#allocation3 + $0x2] sm:$0xf]
        %s887 = scalar_lea.vmem [#allocation11], 512
        %v888 = vld [vmem:[%s887] sm:$0xff]
        %v889 = vld [vmem:[%s887 + $0x8] sm:$0xff]
        %v890 = vld [vmem:[%s887 + $0x10] sm:$0xff]
        %v891 = vld [vmem:[%s887 + $0x18] sm:$0xff]
        %v892 = vld [vmem:[%s887 + $0x20] sm:$0xff]
        %v893 = vld [vmem:[%s887 + $0x28] sm:$0xff]
        %v894 = vld [vmem:[%s887 + $0x30] sm:$0xff]
        %v895 = vld [vmem:[%s887 + $0x38] sm:$0xff]
        %v896 = vld [vmem:[%s887 + $0x40] sm:$0xff]
        %v897 = vld [vmem:[%s887 + $0x48] sm:$0xff]
        %v898 = vld [vmem:[%s887 + $0x50] sm:$0xff]
        %v899 = vld [vmem:[%s887 + $0x58] sm:$0xff]
        %v900 = vld [vmem:[%s887 + $0x60] sm:$0xff]
        %v901 = vld [vmem:[%s887 + $0x68] sm:$0xff]
        %v902 = vld [vmem:[%s887 + $0x70] sm:$0xff]
        %v903 = vld [vmem:[%s887 + $0x78] sm:$0xff]
        %v904 = vld [vmem:[%s887 + $0x80] sm:$0xff]
        %v905 = vld [vmem:[%s887 + $0x88] sm:$0xff]
        %v906 = vld [vmem:[%s887 + $0x90] sm:$0xff]
        %v907 = vld [vmem:[%s887 + $0x98] sm:$0xff]
        %v908 = vld [vmem:[%s887 + $0xa0] sm:$0xff]
        %v909 = vld [vmem:[%s887 + $0xa8] sm:$0xff]
        %v910 = vld [vmem:[%s887 + $0xb0] sm:$0xff]
        %v911 = vld [vmem:[%s887 + $0xb8] sm:$0xff]
        %v912 = vld [vmem:[%s887 + $0xc0] sm:$0xff]
        %v913 = vld [vmem:[%s887 + $0xc8] sm:$0xff]
        %v914 = vld [vmem:[%s887 + $0xd0] sm:$0xff]
        %v915 = vld [vmem:[%s887 + $0xd8] sm:$0xff]
        %v916 = vld [vmem:[%s887 + $0xe0] sm:$0xff]
        %v917 = vld [vmem:[%s887 + $0xe8] sm:$0xff]
        %v918 = vld [vmem:[%s887 + $0xf0] sm:$0xff]
        %v919 = vld [vmem:[%s887 + $0xf8] sm:$0xff]
        %920 = vmatprep.subr.mxu0 %v889
        %921 = vmatpush1.msra.mxu0 %v888
        %922 = vmatprep.subr.mxu0 %v891
        %923 = vmatpush1.msra.mxu0 %v890
        %924 = vmatprep.subr.mxu0 %v893
        %925 = vmatpush1.msra.mxu0 %v892
        %926 = vmatprep.subr.mxu0 %v895
        %927 = vmatpush1.msra.mxu0 %v894
        %928 = vmatprep.subr.mxu0 %v897
        %929 = vmatpush1.msra.mxu0 %v896
        %930 = vmatprep.subr.mxu0 %v899
        %931 = vmatpush1.msra.mxu0 %v898
        %932 = vmatprep.subr.mxu0 %v901
        %933 = vmatpush1.msra.mxu0 %v900
        %934 = vmatprep.subr.mxu0 %v903
        %935 = vmatpush1.msra.mxu0 %v902
        %936 = vmatprep.subr.mxu0 %v905
        %937 = vmatpush1.msra.mxu0 %v904
        %938 = vmatprep.subr.mxu0 %v907
        %939 = vmatpush1.msra.mxu0 %v906
        %940 = vmatprep.subr.mxu0 %v909
        %941 = vmatpush1.msra.mxu0 %v908
        %942 = vmatprep.subr.mxu0 %v911
        %943 = vmatpush1.msra.mxu0 %v910
        %944 = vmatprep.subr.mxu0 %v913
        %945 = vmatpush1.msra.mxu0 %v912
        %946 = vmatprep.subr.mxu0 %v915
        %947 = vmatpush1.msra.mxu0 %v914
        %948 = vmatprep.subr.mxu0 %v917
        %949 = vmatpush1.msra.mxu0 %v916
        %950 = vmatprep.subr.mxu0 %v919
        %951 = vmatpush1.msra.mxu0 %v918
        %952 = vmatprep.subr.mxu0 0.0
        %953 = vmatpush1.msra.mxu0 0.0
        %954 = vmatprep.subr.mxu0 0.0
        %955 = vmatpush1.msra.mxu0 0.0
        %956 = vmatprep.subr.mxu0 0.0
        %957 = vmatpush1.msra.mxu0 0.0
        %958 = vmatprep.subr.mxu0 0.0
        %959 = vmatpush1.msra.mxu0 0.0
        %960 = vmatprep.subr.mxu0 0.0
        %961 = vmatpush1.msra.mxu0 0.0
        %962 = vmatprep.subr.mxu0 0.0
        %963 = vmatpush1.msra.mxu0 0.0
        %964 = vmatprep.subr.mxu0 0.0
        %965 = vmatpush1.msra.mxu0 0.0
        %966 = vmatprep.subr.mxu0 0.0
        %967 = vmatpush1.msra.mxu0 0.0
        %968 = vmatprep.subr.mxu0 0.0
        %969 = vmatpush1.msra.mxu0 0.0
        %970 = vmatprep.subr.mxu0 0.0
        %971 = vmatpush1.msra.mxu0 0.0
        %972 = vmatprep.subr.mxu0 0.0
        %973 = vmatpush1.msra.mxu0 0.0
        %974 = vmatprep.subr.mxu0 0.0
        %975 = vmatpush1.msra.mxu0 0.0
        %976 = vmatprep.subr.mxu0 0.0
        %977 = vmatpush1.msra.mxu0 0.0
        %978 = vmatprep.subr.mxu0 0.0
        %979 = vmatpush1.msra.mxu0 0.0
        %980 = vmatprep.subr.mxu0 0.0
        %981 = vmatpush1.msra.mxu0 0.0
        %982 = vmatprep.subr.mxu0 0.0
        %983 = vmatpush1.msra.mxu0 0.0
        %984 = vmatprep.mubr.f32.mxu0 0.0
        %985 = vmatmul.mubr.f32.gmra.mrb[0].mxu0 %v886
        %v986 = vpop.f32.mrb[0].mxu0
        %v987 = vadd.f32 0.0, %v986
        %v988 = vpop.f32.mrb[0].mxu0
        %v989 = vadd.f32 0.0, %v988
        %990 = vdwg.mxu0
        %v991 = vadd.f32 %v882, %v987
        %v992 = vadd.f32 %v884, %v989
        %v993 = vmax.f32 %v991, %v992
        %v994 = vld [vmem:[%s4] sm:$0x1]
        %v996 = vlaneseq
        %v997 = vshrl.u32 %v996, 7
        %v998 = vsub.s32 0, %v997
        %v999 = vrot.slane %v994, %v998
        %v1001 = vadd.f32 %v993, %v999
        %v1002 = vmax.f32 %v1001, 0.0
        %1003 = vst [vmem:[#allocation5] sm:$0xf] %v1002
        %v1004 = vld [vmem:[#allocation5] ss:$2 sm:$0x3]
        %s1005 = scalar_lea.vmem [#allocation5], 1
        %v1006 = vld [vmem:[%s1005] ss:$2 sm:$0x3]
        %v1007 = vmax.f32 %v1004, %v1006
        %v1008 = vld [vmem:[#allocation12] sm:$0xff]
        %v1009 = vld [vmem:[#allocation12 + $0x8] sm:$0xff]
        %v1010 = vld [vmem:[#allocation12 + $0x10] sm:$0xff]
        %v1011 = vld [vmem:[#allocation12 + $0x18] sm:$0xff]
        %v1012 = vld [vmem:[#allocation12 + $0x20] sm:$0xff]
        %v1013 = vld [vmem:[#allocation12 + $0x28] sm:$0xff]
        %v1014 = vld [vmem:[#allocation12 + $0x30] sm:$0xff]
        %v1015 = vld [vmem:[#allocation12 + $0x38] sm:$0xff]
        %v1016 = vld [vmem:[#allocation12 + $0x40] sm:$0xff]
        %v1017 = vld [vmem:[#allocation12 + $0x48] sm:$0xff]
        %v1018 = vld [vmem:[#allocation12 + $0x50] sm:$0xff]
        %v1019 = vld [vmem:[#allocation12 + $0x58] sm:$0xff]
        %v1020 = vld [vmem:[#allocation12 + $0x60] sm:$0xff]
        %v1021 = vld [vmem:[#allocation12 + $0x68] sm:$0xff]
        %v1022 = vld [vmem:[#allocation12 + $0x70] sm:$0xff]
        %v1023 = vld [vmem:[#allocation12 + $0x78] sm:$0xff]
        %v1024 = vld [vmem:[%s6] sm:$0x1]
        %v1026 = vlaneseq
        %v1027 = vshrl.u32 %v1026, 7
        %v1028 = vsub.s32 0, %v1027
        %v1029 = vrot.slane %v1024, %v1028
        %1031 = vmatprep.subr.mxu0 0.0
        %1032 = vmatpush1.msra.mxu0 %v1008
        %1033 = vmatprep.subr.mxu0 0.0
        %1034 = vmatpush1.msra.mxu0 %v1009
        %1035 = vmatprep.subr.mxu0 0.0
        %1036 = vmatpush1.msra.mxu0 %v1010
        %1037 = vmatprep.subr.mxu0 0.0
        %1038 = vmatpush1.msra.mxu0 %v1011
        %1039 = vmatprep.subr.mxu0 0.0
        %1040 = vmatpush1.msra.mxu0 %v1012
        %1041 = vmatprep.subr.mxu0 0.0
        %1042 = vmatpush1.msra.mxu0 %v1013
        %1043 = vmatprep.subr.mxu0 0.0
        %1044 = vmatpush1.msra.mxu0 %v1014
        %1045 = vmatprep.subr.mxu0 0.0
        %1046 = vmatpush1.msra.mxu0 %v1015
        %1047 = vmatprep.subr.mxu0 0.0
        %1048 = vmatpush1.msra.mxu0 %v1016
        %1049 = vmatprep.subr.mxu0 0.0
        %1050 = vmatpush1.msra.mxu0 %v1017
        %1051 = vmatprep.subr.mxu0 0.0
        %1052 = vmatpush1.msra.mxu0 %v1018
        %1053 = vmatprep.subr.mxu0 0.0
        %1054 = vmatpush1.msra.mxu0 %v1019
        %1055 = vmatprep.subr.mxu0 0.0
        %1056 = vmatpush1.msra.mxu0 %v1020
        %1057 = vmatprep.subr.mxu0 0.0
        %1058 = vmatpush1.msra.mxu0 %v1021
        %1059 = vmatprep.subr.mxu0 0.0
        %1060 = vmatpush1.msra.mxu0 %v1022
        %1061 = vmatprep.subr.mxu0 0.0
        %1062 = vmatpush1.msra.mxu0 %v1023
        %1063 = vmatprep.subr.mxu0 0.0
        %1064 = vmatpush1.msra.mxu0 0.0
        %1065 = vmatprep.subr.mxu0 0.0
        %1066 = vmatpush1.msra.mxu0 0.0
        %1067 = vmatprep.subr.mxu0 0.0
        %1068 = vmatpush1.msra.mxu0 0.0
        %1069 = vmatprep.subr.mxu0 0.0
        %1070 = vmatpush1.msra.mxu0 0.0
        %1071 = vmatprep.subr.mxu0 0.0
        %1072 = vmatpush1.msra.mxu0 0.0
        %1073 = vmatprep.subr.mxu0 0.0
        %1074 = vmatpush1.msra.mxu0 0.0
        %1075 = vmatprep.subr.mxu0 0.0
        %1076 = vmatpush1.msra.mxu0 0.0
        %1077 = vmatprep.subr.mxu0 0.0
        %1078 = vmatpush1.msra.mxu0 0.0
        %1079 = vmatprep.subr.mxu0 0.0
        %1080 = vmatpush1.msra.mxu0 0.0
        %1081 = vmatprep.subr.mxu0 0.0
        %1082 = vmatpush1.msra.mxu0 0.0
        %1083 = vmatprep.subr.mxu0 0.0
        %1084 = vmatpush1.msra.mxu0 0.0
        %1085 = vmatprep.subr.mxu0 0.0
        %1086 = vmatpush1.msra.mxu0 0.0
        %1087 = vmatprep.subr.mxu0 0.0
        %1088 = vmatpush1.msra.mxu0 0.0
        %1089 = vmatprep.subr.mxu0 0.0
        %1090 = vmatpush1.msra.mxu0 0.0
        %1091 = vmatprep.subr.mxu0 0.0
        %1092 = vmatpush1.msra.mxu0 0.0
        %1093 = vmatprep.subr.mxu0 0.0
        %1094 = vmatpush1.msra.mxu0 0.0
        %1095 = vmatprep.mubr.f32.mxu0 0.0
        %1096 = vmatmul.mubr.f32.gmra.mrb[0].mxu0 %v1007
        %v1097 = vpop.f32.mrb[0].mxu0
        %v1098 = vadd.f32 %v1029, %v1097
        %v1099 = vpop.f32.mrb[0].mxu0
        %1100 = vdwg.mxu0
        %1101 = vst [vmem:[%s337] sm:$0x3] %v1098
        %s1102 = sand.u32 %s186, 1
        %s1103 = scalar_lea.sflag [#allocation8], %s1102
        %s1104 = sand.u32 %s186, 1
        %s1105 = smul.addr %s1104, 2
        %s1106 = scalar_lea.vmem [#allocation14], %s1105
        // Predicated region
        $region65: #{tpu_custom_call.1} parent=47 // pred_check
          %p1107 = pneg %p196
        $region66: #{tpu_custom_call.1} parent=47 // pred_check_branch
          %1109 = sbr.rel (%p1107) target = $region68
        $region67: #{tpu_custom_call.1} parent=47 // pred_region
          %s1111 = ssub.s32 32, 32
          %1112 = vsyncadd %s1103, %s1111
          %s1113 = smul.addr %s26, 32
          %s1114 = scalar_lea.hbm %s7, %s1113
          %s1116 = sshll.u32 %s1106, 4
          %s1117 = int_to_ptr.vmem [resolvable:$true] %s1116
          %1119 = dma.vmem_to_hbm [thread:$0]  %s1117, 32, %s1114, %s1103
        $region68: #{tpu_custom_call.1} parent=47 // pred_fallthru
          _
      $region48: #{tpu_custom_call.1} parent=5 // pred_fallthru
        _
      %p1120 = scmp.le.s32.totalorder 2, %s21
      // Predicated region
      $region69: #{tpu_custom_call.1} parent=5 // pred_check
        %p1121 = pneg %p1120
      $region70: #{tpu_custom_call.1} parent=5 // pred_check_branch
        %1123 = sbr.rel (%p1121) target = $region72
      $region71: #{tpu_custom_call.1} parent=5 // pred_region
        %s1124 = ssub.s32 %s21, 2
        // Predicated region
        $region73: #{tpu_custom_call.1} parent=71 // pred_check
          %p1125 = pneg %p202
        $region74: #{tpu_custom_call.1} parent=71 // pred_check_branch
          %1127 = sbr.rel (%p1125) target = $region76
        $region75: #{tpu_custom_call.1} parent=71 // pred_region
          %s1128 = sand.u32 %s187, 1
          %s1129 = scalar_lea.sflag [#allocation8], %s1128
          %s1130 = sand.u32 %s187, 1
          %s1131 = smul.addr %s1130, 2
          %s1132 = scalar_lea.vmem [#allocation14], %s1131
          %1133 = dma.done %s1129, 32
        $region76: #{tpu_custom_call.1} parent=71 // pred_fallthru
          _
      $region72: #{tpu_custom_call.1} parent=5 // pred_fallthru
        _
    $region6: #{tpu_custom_call.1} parent=1 // loop_footer
      %s25 = sadd.s32 1, %s21
    $region7: #{tpu_custom_call.1} parent=1 // loop_footer_branch
      %20 = sbr.rel target = $region3
    $region8: #{tpu_custom_call.1} parent=1 // loop_exit
      _
    %1134 = vsyncpa [#allocation7], 1
    %s1135 = scalar_lea.sflag [#allocation7], 1
    %1136 = vsyncpa %s1135, 1
    %1137 = vsyncpa [#allocation10], 1
    %1138 = vsyncpa [#allocation13], 1
    %1139 = vsyncpa [#allocation8], 1
    %s1140 = scalar_lea.sflag [#allocation8], 1
    %1141 = vsyncpa %s1140, 1

</llo_original>
